<compile_context>
chip_gen: v6e
topology: v6e:2x2x1
jax: 0.10.0
libtpu: 0.0.40
codegen_flags: <defaults>
</compile_context>

<pallas_src>
import math

import jax
import jax.numpy as jnp
from jax.experimental import pallas as pl
from jax.experimental.pallas import tpu as pltpu


def _pos_enc_eval_kernel(x_ref, pe_ref, o_ref):
    # x_ref: [tS, B, D]; pe_ref: [tS, D] -> broadcast over the batch (sublane) axis.
    o_ref[...] = (x_ref[...] + pe_ref[...][:, None, :]).astype(o_ref.dtype)


def _pos_enc_train_kernel(x_ref, pe_ref, mask_ref, o_ref):
    # mask_ref already holds keep/(1-p) in x.dtype -> a single VPU multiply,
    # fully hidden under the HBM-bound streaming.
    y = (x_ref[...] + pe_ref[...][:, None, :]) * mask_ref[...]
    o_ref[...] = y.astype(o_ref.dtype)


def make_sinusoidal_table(max_len, d_model, dtype=jnp.float32):
    """pe[pos, 2i] = sin(pos / 10000^(2i/D)); pe[pos, 2i+1] = cos(...)."""
    position = jnp.arange(max_len, dtype=jnp.float32)[:, None]
    div_term = jnp.exp(jnp.arange(0, d_model, 2, dtype=jnp.float32)
                       * (-math.log(10000.0) / d_model))
    angles = position * div_term                       # [max_len, D//2]
    pe = jnp.zeros((max_len, d_model), dtype=jnp.float32)
    pe = pe.at[:, 0::2].set(jnp.sin(angles))
    pe = pe.at[:, 1::2].set(jnp.cos(angles))
    return pe.astype(dtype)


def _choose_seq_tile(S, B, D, itemsize, *, target_block_bytes=3 << 20,
                     vmem_ws_budget=40 << 20):
    """Byte-budget the seq tile:
       - ~2-4 MiB x blocks (amortizes the ~0.35us per-grid-step overhead),
       - >= 2 grid steps so both v7x TensorCores stream,
       - worst-case double-buffered working set well under v7x's 64 MiB VMEM."""
    row_bytes = B * D * itemsize
    tS = max(1, target_block_bytes // row_bytes)
    if S >= 2:
        tS = min(tS, pl.cdiv(S, 2))          # guarantee at least 2 tiles
    tS = min(tS, S)

    def working_set(t):
        # worst case (training): x + mask + out (x-sized) + pe, all double-buffered
        return 2 * (3 * t * B * D + t * D) * itemsize

    while tS > 1 and working_set(tS) > vmem_ws_budget:
        tS //= 2
    return int(tS)


def positional_encoding(x, pe, *, p=0.1, training=False, rng=None):
    """x: [S, B, D]; pe: [max_len, D] with max_len >= S. Returns x + pe[:S] (+dropout)."""
    S, B, D = x.shape
    assert pe.shape[0] >= S and pe.shape[1] == D
    pe = pe.astype(x.dtype)

    itemsize = jnp.dtype(x.dtype).itemsize
    tS = _choose_seq_tile(S, B, D, itemsize)
    grid = (pl.cdiv(S, tS),)                 # partial last tile handled by Pallas

    x_spec = pl.BlockSpec((tS, B, D), lambda i: (i, 0, 0))
    pe_spec = pl.BlockSpec((tS, D), lambda i: (i, 0))   # rows read straight from the full table
    compiler_params = pltpu.CompilerParams(
        dimension_semantics=("parallel",),              # seq tiles -> both v7x TCs
        vmem_limit_bytes=48 * 1024 * 1024,              # fits v5e/v6e/v7x; tile sized to it
    )

    if training and p > 0.0:
        if p >= 1.0:                                    # clamp: everything dropped
            return jnp.zeros_like(x)
        if rng is None:
            raise ValueError("training=True with p>0 requires an rng key")
        # Inverted dropout via a precomputed keep/(1-p) mask (platform-portable;
        # no in-kernel hardware PRNG, which has no interpret/CPU lowering).
        # TODO(synk): switch to pltpu.prng_random_bits when an on-device-only path is acceptable.
        keep = jax.random.bernoulli(rng, 1.0 - p, shape=x.shape)
        mask = keep.astype(x.dtype) * jnp.asarray(1.0 / (1.0 - p), dtype=x.dtype)
        return pl.pallas_call(
            _pos_enc_train_kernel,
            out_shape=jax.ShapeDtypeStruct((S, B, D), x.dtype),
            grid=grid,
            in_specs=[x_spec, pe_spec, x_spec],
            out_specs=x_spec,
            compiler_params=compiler_params,
        )(x, pe, mask)

    return pl.pallas_call(
        _pos_enc_eval_kernel,
        out_shape=jax.ShapeDtypeStruct((S, B, D), x.dtype),
        grid=grid,
        in_specs=[x_spec, pe_spec],
        out_specs=x_spec,
        compiler_params=compiler_params,
    )(x, pe)


if __name__ == "__main__":
    max_len = 5000
    d_model = 128          # multiple of 128 -> lane-dense blocks
    S, B = 256, 8          # small test shapes; grid = (2,) exercises multi-tile path

    key = jax.random.PRNGKey(0)
    kx, kd = jax.random.split(key)
    x = jax.random.normal(kx, (S, B, d_model), dtype=jnp.float32)
    pe = make_sinusoidal_table(max_len, d_model)
    ref = x + pe[:S][:, None, :]

    # Eval mode (dropout = identity): must match the pure-JAX reference.
    out = positional_encoding(x, pe, p=0.1, training=False)
    jax.block_until_ready(out)
    assert out.shape == (S, B, d_model)
    assert jnp.allclose(out, ref, atol=1e-6, rtol=1e-6)

    # Training mode: inverted dropout via a precomputed keep mask.
    p = 0.1
    out_t = positional_encoding(x, pe, p=p, training=True, rng=kd)
    jax.block_until_ready(out_t)
    keep = jax.random.bernoulli(kd, 1.0 - p, shape=x.shape)
    ref_t = ref * keep.astype(ref.dtype) / (1.0 - p)
    assert jnp.allclose(out_t, ref_t, atol=1e-5, rtol=1e-5)
    drop_frac = float(jnp.mean(1.0 - keep.astype(jnp.float32)))
    assert 0.05 < drop_frac < 0.15, drop_frac

    print("KERNEL_OK")
</pallas_src>

<mosaic_0001>
module attributes {stable_mosaic.version = 11 : i64} {
  func.func @_pos_enc_eval_kernel(%arg0: i32, %arg1: memref<128x8x128xf32, #tpu.memory_space<vmem>>, %arg2: memref<128x128xf32, #tpu.memory_space<vmem>>, %arg3: memref<128x8x128xf32, #tpu.memory_space<vmem>>) attributes {dimension_semantics = [#tpu.dimension_semantics<parallel>], iteration_bounds = array<i64: 2>, scalar_prefetch = 0 : i64, scratch_operands = 0 : i64, tpu.core_type = #tpu.core_type<tc>, window_params = [{transform_indices = @transform_0, window_bounds = array<i64: 128, 8, 128>}, {transform_indices = @transform_1, window_bounds = array<i64: 128, 128>}, {transform_indices = @transform_2, window_bounds = array<i64: 128, 8, 128>}]} {
    %c0 = arith.constant 0 : index
    %c0_0 = arith.constant 0 : index
    %c0_1 = arith.constant 0 : index
    %0 = vector.load %arg1[%c0, %c0_0, %c0_1] : memref<128x8x128xf32, #tpu.memory_space<vmem>>, vector<128x8x128xf32>
    %c0_2 = arith.constant 0 : index
    %c0_3 = arith.constant 0 : index
    %1 = vector.load %arg2[%c0_2, %c0_3] : memref<128x128xf32, #tpu.memory_space<vmem>>, vector<128x128xf32>
    %2 = vector.shape_cast %1 : vector<128x128xf32> to vector<128x1x128xf32>
    %3 = vector.broadcast %2 : vector<128x1x128xf32> to vector<128x8x128xf32>
    %4 = arith.addf %0, %3 : vector<128x8x128xf32>
    %c0_4 = arith.constant 0 : index
    %c0_5 = arith.constant 0 : index
    %c0_6 = arith.constant 0 : index
    %5 = vector.load %arg3[%c0_4, %c0_5, %c0_6] : memref<128x8x128xf32, #tpu.memory_space<vmem>>, vector<128x8x128xf32>
    tpu.vector_store %arg3[%c0_4, %c0_5, %c0_6], %4 {strides = array<i32>} : memref<128x8x128xf32, #tpu.memory_space<vmem>>, vector<128x8x128xf32>,
    return
  }
  func.func @transform_0(%arg0: i32) -> (i32, i32, i32) {
    %c0_i32 = arith.constant 0 : i32
    %c0_i32_0 = arith.constant 0 : i32
    %c0_i32_1 = arith.constant 0 : i32
    return %arg0, %c0_i32, %c0_i32_0 : i32, i32, i32
  }
  func.func @transform_1(%arg0: i32) -> (i32, i32) {
    %c0_i32 = arith.constant 0 : i32
    %c0_i32_0 = arith.constant 0 : i32
    return %arg0, %c0_i32 : i32, i32
  }
  func.func @transform_2(%arg0: i32) -> (i32, i32, i32) {
    %c0_i32 = arith.constant 0 : i32
    %c0_i32_0 = arith.constant 0 : i32
    %c0_i32_1 = arith.constant 0 : i32
    return %arg0, %c0_i32, %c0_i32_0 : i32, i32, i32
  }
}

</mosaic_0001>

<llo_original>
// kernel: tpu_custom_call.1
$region0: #{tpu_custom_call.1}
  #allocation0 [shape = 'u32[]', space=smem, size = 0x4, offset = 0x4, fixed_abs, tag = 'smem constant byte address 0x4 - core index']
  #allocation1 [shape = 'u32[144,128]{1,0:T(1,128)}', space=vmem, size = 0x12000, scoped, tag = 'internal scratch']
  %s0 = inlined_call_operand.hbm [shape: f32[256,8,128], index: 0, kind: input, shape index: {}]
  %s1 = inlined_call_operand.hbm [shape: f32[5000,128], index: 1, kind: input, shape index: {}]
  %s2 = inlined_call_operand.hbm [shape: f32[256,8,128], index: 2, kind: output, shape index: {}]
  %s3 = sld [smem:[#allocation0]]
  $region49: #{tpu_custom_call.1} parent=0
    _
  %s5 = ssub.s32 1, %s3
  %s6 = scalar_select 0, %s5, %s3
  $region1: #{tpu_custom_call.1} parent=0
    #allocation2 [shape = 'u8[1048576]{0}', space=vmem, size = 0x100000, scoped, tag = 'input window, operand 0']
    #allocation3 [shape = 's32[2]{0}', space=sflag, size = 0x8, scoped, tag = 'scoped memory for tpu_custom_call.1']
    #allocation4 [shape = 's32[2]{0}', space=sflag, size = 0x8, scoped, tag = 'scoped memory for tpu_custom_call.1']
    #allocation5 [shape = 'u8[131072]{0}', space=vmem, size = 0x20000, scoped, tag = 'input window, operand 1']
    #allocation6 [shape = 's32[2]{0}', space=sflag, size = 0x8, scoped, tag = 'scoped memory for tpu_custom_call.1']
    #allocation7 [shape = 'u8[1048576]{0}', space=vmem, size = 0x100000, scoped, tag = 'output window, operand 0']
    %7 = vsyncpa [#allocation3], 0
    %s8 = scalar_lea.sflag [#allocation3], 1
    %9 = vsyncpa %s8, 0
    %10 = vsyncpa [#allocation6], 0
    %s11 = scalar_lea.sflag [#allocation6], 1
    %12 = vsyncpa %s11, 0
    %13 = vsyncpa [#allocation4], 0
    %s14 = scalar_lea.sflag [#allocation4], 1
    %15 = vsyncpa %s14, 0
    loop: start=0, step=1, limit=4
    $region2: #{tpu_custom_call.1} parent=1 // loop_pre_header
      _
    $region3: #{tpu_custom_call.1} parent=1 // loop_header
      %s17 = sphi 0, %s21
      %p18 = scmp.ge.s32.totalorder %s17, 4
      %s27 = sphi 0, %s29
      %s30 = sphi 0, %s27
      %s31 = sphi 0, %s30
      %s47 = sphi 0, %s31
      %s53 = sphi 0, %s55
      %s56 = sphi 0, %s53
      %s57 = sphi 0, %s56
      %s73 = sphi 0, %s57
      %s79 = sphi 0, %s81
      %s82 = sphi 0, %s79
      %s83 = sphi 0, %s82
      %s99 = sphi 0, %s83
    $region4: #{tpu_custom_call.1} parent=1 // loop_header_branch
      %20 = sbr.rel (%p18) target = $region8
    $region5: #{tpu_custom_call.1} parent=1 // loop_body
      %s22 = ssub.s32 %s17, 1
      %s23 = ssub.s32 %s17, 2
      %s24 = sadd.s32 %s17, 1
      %s25 = ssub.s32 %s17, %s24
      %p26 = scmp.eq.s32.totalorder %s25, 0
      %s28 = sadd.s32 %s27, 1
      %s29 = scalar_select %p26, %s27, %s28
      %p32 = pneg %p26
      %p33 = scmp.eq.s32.totalorder %s17, 1
      %p34 = por %p32, %p33
      %p35 = scmp.ne.s32.totalorder %s27, %s30
      %p36 = scmp.eq.s32.totalorder %s17, 0
      %p37 = por %p35, %p36
      %p38 = scmp.ne.s32.totalorder %s27, %s30
      %p39 = scmp.eq.s32.totalorder %s22, 1
      %p40 = por %p38, %p39
      %p41 = scmp.ne.s32.totalorder %s30, %s31
      %p42 = scmp.eq.s32.totalorder %s22, 0
      %p43 = por %p41, %p42
      %p44 = scmp.ne.s32.totalorder %s30, %s31
      %p45 = scmp.eq.s32.totalorder %s23, 1
      %p46 = por %p44, %p45
      %p48 = scmp.ne.s32.totalorder %s31, %s47
      %p49 = scmp.eq.s32.totalorder %s23, 0
      %p50 = por %p48, %p49
      %s51 = ssub.s32 %s17, %s24
      %p52 = scmp.eq.s32.totalorder %s51, 0
      %s54 = sadd.s32 %s53, 1
      %s55 = scalar_select %p52, %s53, %s54
      %p58 = pneg %p52
      %p59 = scmp.eq.s32.totalorder %s17, 1
      %p60 = por %p58, %p59
      %p61 = scmp.ne.s32.totalorder %s53, %s56
      %p62 = scmp.eq.s32.totalorder %s17, 0
      %p63 = por %p61, %p62
      %p64 = scmp.ne.s32.totalorder %s53, %s56
      %p65 = scmp.eq.s32.totalorder %s22, 1
      %p66 = por %p64, %p65
      %p67 = scmp.ne.s32.totalorder %s56, %s57
      %p68 = scmp.eq.s32.totalorder %s22, 0
      %p69 = por %p67, %p68
      %p70 = scmp.ne.s32.totalorder %s56, %s57
      %p71 = scmp.eq.s32.totalorder %s23, 1
      %p72 = por %p70, %p71
      %p74 = scmp.ne.s32.totalorder %s57, %s73
      %p75 = scmp.eq.s32.totalorder %s23, 0
      %p76 = por %p74, %p75
      %s77 = ssub.s32 %s17, %s24
      %p78 = scmp.eq.s32.totalorder %s77, 0
      %s80 = sadd.s32 %s79, 1
      %s81 = scalar_select %p78, %s79, %s80
      %p84 = pneg %p78
      %p85 = scmp.eq.s32.totalorder %s17, 1
      %p86 = por %p84, %p85
      %p87 = scmp.ne.s32.totalorder %s79, %s82
      %p88 = scmp.eq.s32.totalorder %s17, 0
      %p89 = por %p87, %p88
      %p90 = scmp.ne.s32.totalorder %s79, %s82
      %p91 = scmp.eq.s32.totalorder %s22, 1
      %p92 = por %p90, %p91
      %p93 = scmp.ne.s32.totalorder %s82, %s83
      %p94 = scmp.eq.s32.totalorder %s22, 0
      %p95 = por %p93, %p94
      %p96 = scmp.ne.s32.totalorder %s82, %s83
      %p97 = scmp.eq.s32.totalorder %s23, 1
      %p98 = por %p96, %p97
      %p100 = scmp.ne.s32.totalorder %s83, %s99
      %p101 = scmp.eq.s32.totalorder %s23, 0
      %p102 = por %p100, %p101
      %p103 = scmp.le.s32.totalorder 1, %s17
      %p104 = scmp.lt.s32.totalorder %s17, 3
      %p105 = pnand %p103, %p104
      %p106 = pneg %p105
      // Predicated region
      $region9: #{tpu_custom_call.1} parent=5 // pred_check
        _
      $region10: #{tpu_custom_call.1} parent=5 // pred_check_branch
        %108 = sbr.rel (%p105) target = $region12
      $region11: #{tpu_custom_call.1} parent=5 // pred_region
        %s109 = ssub.s32 %s17, 1
      $region12: #{tpu_custom_call.1} parent=5 // pred_fallthru
        _
      %p110 = scmp.lt.s32.totalorder %s17, 2
      // Predicated region
      $region13: #{tpu_custom_call.1} parent=5 // pred_check
        %p111 = pneg %p110
      $region14: #{tpu_custom_call.1} parent=5 // pred_check_branch
        %113 = sbr.rel (%p111) target = $region16
      $region15: #{tpu_custom_call.1} parent=5 // pred_region
        // Predicated region
        $region17: #{tpu_custom_call.1} parent=15 // pred_check
          %p114 = pneg %p37
        $region18: #{tpu_custom_call.1} parent=15 // pred_check_branch
          %116 = sbr.rel (%p114) target = $region20
        $region19: #{tpu_custom_call.1} parent=15 // pred_region
          %s117 = sand.u32 %s27, 1
          %s118 = scalar_lea.sflag [#allocation3], %s117
          %s119 = sand.u32 %s27, 1
          %s120 = smul.addr %s119, 1024
          %s121 = scalar_lea.vmem [#allocation2], %s120
          %s122 = smul.u32 128, %s17
          %s124 = ssub.s32 16384, 16384
          %125 = vsyncadd %s118, %s124
          %s126 = smul.addr %s122, 128
          %s127 = scalar_lea.hbm %s0, %s126
          %s128 = sshll.u32 %s121, 4
          %s129 = int_to_ptr.vmem [resolvable:$true] %s128
          %134 = dma.hbm_to_vmem [thread:$0]  %s127, 16384, %s129, %s118, 128, 128, 8
        $region20: #{tpu_custom_call.1} parent=15 // pred_fallthru
          _
        // Predicated region
        $region21: #{tpu_custom_call.1} parent=15 // pred_check
          %p135 = pneg %p63
        $region22: #{tpu_custom_call.1} parent=15 // pred_check_branch
          %137 = sbr.rel (%p135) target = $region24
        $region23: #{tpu_custom_call.1} parent=15 // pred_region
          %s138 = sand.u32 %s53, 1
          %s139 = scalar_lea.sflag [#allocation6], %s138
          %s140 = sand.u32 %s53, 1
          %s141 = smul.addr %s140, 128
          %s142 = scalar_lea.vmem [#allocation5], %s141
          %s143 = smul.u32 16, %s17
          %s144 = ssub.s32 625, %s143
          %p145 = scmp.lt.s32.totalorder %s144, 16
          %s146 = scalar_select %p145, %s144, 16
          %s147 = smul.u32 128, %s146
          %s149 = ssub.s32 2048, %s147
          %150 = vsyncadd %s139, %s149
          %p151 = scmp.ne.s32.totalorder 0, %s147
          %s152 = smul.addr %s143, 128
          %s153 = scalar_lea.hbm %s1, %s152
          %s154 = smul.u32 8, %s146
          %s155 = sshll.u32 %s142, 4
          %s156 = int_to_ptr.vmem [resolvable:$true] %s155
          %s157 = sshll.u32 %s154, 4
          %161 = dma.hbm_to_vmem [thread:$0]  (%p151), %s153, %s157, %s156, %s139, 128, 128, 8
        $region24: #{tpu_custom_call.1} parent=15 // pred_fallthru
          _
      $region16: #{tpu_custom_call.1} parent=5 // pred_fallthru
        _
      %p162 = scmp.le.s32.totalorder 1, %s17
      %p163 = scmp.lt.s32.totalorder %s17, 3
      %p164 = pnand %p162, %p163
      %p165 = pneg %p164
      // Predicated region
      $region25: #{tpu_custom_call.1} parent=5 // pred_check
        _
      $region26: #{tpu_custom_call.1} parent=5 // pred_check_branch
        %167 = sbr.rel (%p164) target = $region28
      $region27: #{tpu_custom_call.1} parent=5 // pred_region
        %s168 = ssub.s32 %s17, 1
        %s169 = sand.u32 %s30, 1
        %s170 = scalar_lea.sflag [#allocation3], %s169
        %s171 = sand.u32 %s30, 1
        %s172 = smul.addr %s171, 1024
        %s173 = scalar_lea.vmem [#allocation2], %s172
        // Predicated region
        $region29: #{tpu_custom_call.1} parent=27 // pred_check
          %p174 = pneg %p43
        $region30: #{tpu_custom_call.1} parent=27 // pred_check_branch
          %176 = sbr.rel (%p174) target = $region32
        $region31: #{tpu_custom_call.1} parent=27 // pred_region
          %177 = dma.done %s170, 16384
        $region32: #{tpu_custom_call.1} parent=27 // pred_fallthru
          _
        %s178 = sand.u32 %s56, 1
        %s179 = scalar_lea.sflag [#allocation6], %s178
        %s180 = sand.u32 %s56, 1
        %s181 = smul.addr %s180, 128
        %s182 = scalar_lea.vmem [#allocation5], %s181
        // Predicated region
        $region33: #{tpu_custom_call.1} parent=27 // pred_check
          %p183 = pneg %p69
        $region34: #{tpu_custom_call.1} parent=27 // pred_check_branch
          %185 = sbr.rel (%p183) target = $region36
        $region35: #{tpu_custom_call.1} parent=27 // pred_region
          %186 = dma.done %s179, 2048
        $region36: #{tpu_custom_call.1} parent=27 // pred_fallthru
          _
        %s187 = sand.u32 %s30, 1
        %s188 = scalar_lea.sflag [#allocation3], %s187
        %s189 = sand.u32 %s30, 1
        %s190 = smul.addr %s189, 1024
        %s191 = scalar_lea.vmem [#allocation2], %s190
        %p192 = pneg %p43
        %p193 = pneg %p40
        %s194 = sand.u32 %s56, 1
        %s195 = scalar_lea.sflag [#allocation6], %s194
        %s196 = sand.u32 %s56, 1
        %s197 = smul.addr %s196, 128
        %s198 = scalar_lea.vmem [#allocation5], %s197
        %p199 = pneg %p69
        %p200 = pneg %p66
        %p201 = pneg %p95
        %p202 = pneg %p92
        %s203 = sand.u32 %s82, 1
        %s204 = scalar_lea.sflag [#allocation4], %s203
        %s205 = sand.u32 %s82, 1
        %s206 = smul.addr %s205, 1024
        %s207 = scalar_lea.vmem [#allocation7], %s206
        %s208 = smul.u32 128, %s22
        %s209 = smul.u32 16, %s22
        %s210 = ssub.s32 625, %s209
        %p211 = scmp.lt.s32.totalorder %s210, 16
        %s212 = scalar_select %p211, %s210, 16
        %s213 = smul.u32 128, %s212
        %s214 = smul.u32 128, %s22
        %v215 = vld [vmem:[%s173] sm:$0xff]
        %v216 = vld [vmem:[%s173 + $0x8] sm:$0xff]
        %v217 = vld [vmem:[%s173 + $0x10] sm:$0xff]
        %v218 = vld [vmem:[%s173 + $0x18] sm:$0xff]
        %v219 = vld [vmem:[%s173 + $0x20] sm:$0xff]
        %v220 = vld [vmem:[%s173 + $0x28] sm:$0xff]
        %v221 = vld [vmem:[%s173 + $0x30] sm:$0xff]
        %v222 = vld [vmem:[%s173 + $0x38] sm:$0xff]
        %v223 = vld [vmem:[%s173 + $0x40] sm:$0xff]
        %v224 = vld [vmem:[%s173 + $0x48] sm:$0xff]
        %v225 = vld [vmem:[%s173 + $0x50] sm:$0xff]
        %v226 = vld [vmem:[%s173 + $0x58] sm:$0xff]
        %v227 = vld [vmem:[%s173 + $0x60] sm:$0xff]
        %v228 = vld [vmem:[%s173 + $0x68] sm:$0xff]
        %v229 = vld [vmem:[%s173 + $0x70] sm:$0xff]
        %v230 = vld [vmem:[%s173 + $0x78] sm:$0xff]
        %v231 = vld [vmem:[%s173 + $0x80] sm:$0xff]
        %v232 = vld [vmem:[%s173 + $0x88] sm:$0xff]
        %v233 = vld [vmem:[%s173 + $0x90] sm:$0xff]
        %v234 = vld [vmem:[%s173 + $0x98] sm:$0xff]
        %v235 = vld [vmem:[%s173 + $0xa0] sm:$0xff]
        %v236 = vld [vmem:[%s173 + $0xa8] sm:$0xff]
        %v237 = vld [vmem:[%s173 + $0xb0] sm:$0xff]
        %v238 = vld [vmem:[%s173 + $0xb8] sm:$0xff]
        %v239 = vld [vmem:[%s173 + $0xc0] sm:$0xff]
        %v240 = vld [vmem:[%s173 + $0xc8] sm:$0xff]
        %v241 = vld [vmem:[%s173 + $0xd0] sm:$0xff]
        %v242 = vld [vmem:[%s173 + $0xd8] sm:$0xff]
        %v243 = vld [vmem:[%s173 + $0xe0] sm:$0xff]
        %v244 = vld [vmem:[%s173 + $0xe8] sm:$0xff]
        %v245 = vld [vmem:[%s173 + $0xf0] sm:$0xff]
        %v246 = vld [vmem:[%s173 + $0xf8] sm:$0xff]
        %v247 = vld [vmem:[%s173 + $0x100] sm:$0xff]
        %v248 = vld [vmem:[%s173 + $0x108] sm:$0xff]
        %v249 = vld [vmem:[%s173 + $0x110] sm:$0xff]
        %v250 = vld [vmem:[%s173 + $0x118] sm:$0xff]
        %v251 = vld [vmem:[%s173 + $0x120] sm:$0xff]
        %v252 = vld [vmem:[%s173 + $0x128] sm:$0xff]
        %v253 = vld [vmem:[%s173 + $0x130] sm:$0xff]
        %v254 = vld [vmem:[%s173 + $0x138] sm:$0xff]
        %v255 = vld [vmem:[%s173 + $0x140] sm:$0xff]
        %v256 = vld [vmem:[%s173 + $0x148] sm:$0xff]
        %v257 = vld [vmem:[%s173 + $0x150] sm:$0xff]
        %v258 = vld [vmem:[%s173 + $0x158] sm:$0xff]
        %v259 = vld [vmem:[%s173 + $0x160] sm:$0xff]
        %v260 = vld [vmem:[%s173 + $0x168] sm:$0xff]
        %v261 = vld [vmem:[%s173 + $0x170] sm:$0xff]
        %v262 = vld [vmem:[%s173 + $0x178] sm:$0xff]
        %v263 = vld [vmem:[%s173 + $0x180] sm:$0xff]
        %v264 = vld [vmem:[%s173 + $0x188] sm:$0xff]
        %v265 = vld [vmem:[%s173 + $0x190] sm:$0xff]
        %v266 = vld [vmem:[%s173 + $0x198] sm:$0xff]
        %v267 = vld [vmem:[%s173 + $0x1a0] sm:$0xff]
        %v268 = vld [vmem:[%s173 + $0x1a8] sm:$0xff]
        %v269 = vld [vmem:[%s173 + $0x1b0] sm:$0xff]
        %v270 = vld [vmem:[%s173 + $0x1b8] sm:$0xff]
        %v271 = vld [vmem:[%s173 + $0x1c0] sm:$0xff]
        %v272 = vld [vmem:[%s173 + $0x1c8] sm:$0xff]
        %v273 = vld [vmem:[%s173 + $0x1d0] sm:$0xff]
        %v274 = vld [vmem:[%s173 + $0x1d8] sm:$0xff]
        %v275 = vld [vmem:[%s173 + $0x1e0] sm:$0xff]
        %v276 = vld [vmem:[%s173 + $0x1e8] sm:$0xff]
        %v277 = vld [vmem:[%s173 + $0x1f0] sm:$0xff]
        %v278 = vld [vmem:[%s173 + $0x1f8] sm:$0xff]
        %v279 = vld [vmem:[%s173 + $0x200] sm:$0xff]
        %v280 = vld [vmem:[%s173 + $0x208] sm:$0xff]
        %v281 = vld [vmem:[%s173 + $0x210] sm:$0xff]
        %v282 = vld [vmem:[%s173 + $0x218] sm:$0xff]
        %v283 = vld [vmem:[%s173 + $0x220] sm:$0xff]
        %v284 = vld [vmem:[%s173 + $0x228] sm:$0xff]
        %v285 = vld [vmem:[%s173 + $0x230] sm:$0xff]
        %v286 = vld [vmem:[%s173 + $0x238] sm:$0xff]
        %v287 = vld [vmem:[%s173 + $0x240] sm:$0xff]
        %v288 = vld [vmem:[%s173 + $0x248] sm:$0xff]
        %v289 = vld [vmem:[%s173 + $0x250] sm:$0xff]
        %v290 = vld [vmem:[%s173 + $0x258] sm:$0xff]
        %v291 = vld [vmem:[%s173 + $0x260] sm:$0xff]
        %v292 = vld [vmem:[%s173 + $0x268] sm:$0xff]
        %v293 = vld [vmem:[%s173 + $0x270] sm:$0xff]
        %v294 = vld [vmem:[%s173 + $0x278] sm:$0xff]
        %v295 = vld [vmem:[%s173 + $0x280] sm:$0xff]
        %v296 = vld [vmem:[%s173 + $0x288] sm:$0xff]
        %v297 = vld [vmem:[%s173 + $0x290] sm:$0xff]
        %v298 = vld [vmem:[%s173 + $0x298] sm:$0xff]
        %v299 = vld [vmem:[%s173 + $0x2a0] sm:$0xff]
        %v300 = vld [vmem:[%s173 + $0x2a8] sm:$0xff]
        %v301 = vld [vmem:[%s173 + $0x2b0] sm:$0xff]
        %v302 = vld [vmem:[%s173 + $0x2b8] sm:$0xff]
        %v303 = vld [vmem:[%s173 + $0x2c0] sm:$0xff]
        %v304 = vld [vmem:[%s173 + $0x2c8] sm:$0xff]
        %v305 = vld [vmem:[%s173 + $0x2d0] sm:$0xff]
        %v306 = vld [vmem:[%s173 + $0x2d8] sm:$0xff]
        %v307 = vld [vmem:[%s173 + $0x2e0] sm:$0xff]
        %v308 = vld [vmem:[%s173 + $0x2e8] sm:$0xff]
        %v309 = vld [vmem:[%s173 + $0x2f0] sm:$0xff]
        %v310 = vld [vmem:[%s173 + $0x2f8] sm:$0xff]
        %v311 = vld [vmem:[%s173 + $0x300] sm:$0xff]
        %v312 = vld [vmem:[%s173 + $0x308] sm:$0xff]
        %v313 = vld [vmem:[%s173 + $0x310] sm:$0xff]
        %v314 = vld [vmem:[%s173 + $0x318] sm:$0xff]
        %v315 = vld [vmem:[%s173 + $0x320] sm:$0xff]
        %v316 = vld [vmem:[%s173 + $0x328] sm:$0xff]
        %v317 = vld [vmem:[%s173 + $0x330] sm:$0xff]
        %v318 = vld [vmem:[%s173 + $0x338] sm:$0xff]
        %v319 = vld [vmem:[%s173 + $0x340] sm:$0xff]
        %v320 = vld [vmem:[%s173 + $0x348] sm:$0xff]
        %v321 = vld [vmem:[%s173 + $0x350] sm:$0xff]
        %v322 = vld [vmem:[%s173 + $0x358] sm:$0xff]
        %v323 = vld [vmem:[%s173 + $0x360] sm:$0xff]
        %v324 = vld [vmem:[%s173 + $0x368] sm:$0xff]
        %v325 = vld [vmem:[%s173 + $0x370] sm:$0xff]
        %v326 = vld [vmem:[%s173 + $0x378] sm:$0xff]
        %v327 = vld [vmem:[%s173 + $0x380] sm:$0xff]
        %v328 = vld [vmem:[%s173 + $0x388] sm:$0xff]
        %v329 = vld [vmem:[%s173 + $0x390] sm:$0xff]
        %v330 = vld [vmem:[%s173 + $0x398] sm:$0xff]
        %v331 = vld [vmem:[%s173 + $0x3a0] sm:$0xff]
        %v332 = vld [vmem:[%s173 + $0x3a8] sm:$0xff]
        %v333 = vld [vmem:[%s173 + $0x3b0] sm:$0xff]
        %v334 = vld [vmem:[%s173 + $0x3b8] sm:$0xff]
        %v335 = vld [vmem:[%s173 + $0x3c0] sm:$0xff]
        %v336 = vld [vmem:[%s173 + $0x3c8] sm:$0xff]
        %v337 = vld [vmem:[%s173 + $0x3d0] sm:$0xff]
        %v338 = vld [vmem:[%s173 + $0x3d8] sm:$0xff]
        %v339 = vld [vmem:[%s173 + $0x3e0] sm:$0xff]
        %v340 = vld [vmem:[%s173 + $0x3e8] sm:$0xff]
        %v341 = vld [vmem:[%s173 + $0x3f0] sm:$0xff]
        %v342 = vld [vmem:[%s173 + $0x3f8] sm:$0xff]
        %v343 = vld [vmem:[%s182] sm:$0xff]
        %v344 = vld [vmem:[%s182 + $0x8] sm:$0xff]
        %v345 = vld [vmem:[%s182 + $0x10] sm:$0xff]
        %v346 = vld [vmem:[%s182 + $0x18] sm:$0xff]
        %v347 = vld [vmem:[%s182 + $0x20] sm:$0xff]
        %v348 = vld [vmem:[%s182 + $0x28] sm:$0xff]
        %v349 = vld [vmem:[%s182 + $0x30] sm:$0xff]
        %v350 = vld [vmem:[%s182 + $0x38] sm:$0xff]
        %v351 = vld [vmem:[%s182 + $0x40] sm:$0xff]
        %v352 = vld [vmem:[%s182 + $0x48] sm:$0xff]
        %v353 = vld [vmem:[%s182 + $0x50] sm:$0xff]
        %v354 = vld [vmem:[%s182 + $0x58] sm:$0xff]
        %v355 = vld [vmem:[%s182 + $0x60] sm:$0xff]
        %v356 = vld [vmem:[%s182 + $0x68] sm:$0xff]
        %v357 = vld [vmem:[%s182 + $0x70] sm:$0xff]
        %v358 = vld [vmem:[%s182 + $0x78] sm:$0xff]
        %v375 = vcombine.high %v343, %v343
        %v377 = vunpack.c.l.s4 1966171168
        %v378 = vunpack.c.0.s8 %v377
        %v379 = vlaneseq
        %v380 = vshrl.u32 %v379, 7
        %v381 = vsub.s32 %v378, %v380
        %v382 = vrot.slane %v343, %v381
        %v384 = vunpack.c.l.s4 1966171168
        %v385 = vunpack.c.0.s8 %v384
        %v386 = vlaneseq
        %v387 = vshrl.u32 %v386, 7
        %v388 = vsub.s32 %v385, %v387
        %v389 = vrot.slane %v375, %v388
        %v390 = vcombine.high %v382, %v382
        %v391 = vcombine.high %v389, %v389
        %v393 = vunpack.c.l.s4 1966171168
        %v394 = vunpack.c.0.s8 %v393
        %v395 = vlaneseq
        %v396 = vshrl.u32 %v395, 7
        %v397 = vsub.s32 %v394, %v396
        %v398 = vrot.slane %v382, %v397
        %v400 = vunpack.c.l.s4 1966171168
        %v401 = vunpack.c.0.s8 %v400
        %v402 = vlaneseq
        %v403 = vshrl.u32 %v402, 7
        %v404 = vsub.s32 %v401, %v403
        %v405 = vrot.slane %v389, %v404
        %v407 = vunpack.c.l.s4 1966171168
        %v408 = vunpack.c.0.s8 %v407
        %v409 = vlaneseq
        %v410 = vshrl.u32 %v409, 7
        %v411 = vsub.s32 %v408, %v410
        %v412 = vrot.slane %v390, %v411
        %v414 = vunpack.c.l.s4 1966171168
        %v415 = vunpack.c.0.s8 %v414
        %v416 = vlaneseq
        %v417 = vshrl.u32 %v416, 7
        %v418 = vsub.s32 %v415, %v417
        %v419 = vrot.slane %v391, %v418
        %v420 = vcombine.high %v398, %v398
        %v421 = vcombine.high %v405, %v405
        %v422 = vcombine.high %v412, %v412
        %v423 = vcombine.high %v419, %v419
        %v424 = vcombine.high %v344, %v344
        %v426 = vunpack.c.l.s4 1966171168
        %v427 = vunpack.c.0.s8 %v426
        %v428 = vlaneseq
        %v429 = vshrl.u32 %v428, 7
        %v430 = vsub.s32 %v427, %v429
        %v431 = vrot.slane %v344, %v430
        %v433 = vunpack.c.l.s4 1966171168
        %v434 = vunpack.c.0.s8 %v433
        %v435 = vlaneseq
        %v436 = vshrl.u32 %v435, 7
        %v437 = vsub.s32 %v434, %v436
        %v438 = vrot.slane %v424, %v437
        %v439 = vcombine.high %v431, %v431
        %v440 = vcombine.high %v438, %v438
        %v442 = vunpack.c.l.s4 1966171168
        %v443 = vunpack.c.0.s8 %v442
        %v444 = vlaneseq
        %v445 = vshrl.u32 %v444, 7
        %v446 = vsub.s32 %v443, %v445
        %v447 = vrot.slane %v431, %v446
        %v449 = vunpack.c.l.s4 1966171168
        %v450 = vunpack.c.0.s8 %v449
        %v451 = vlaneseq
        %v452 = vshrl.u32 %v451, 7
        %v453 = vsub.s32 %v450, %v452
        %v454 = vrot.slane %v438, %v453
        %v456 = vunpack.c.l.s4 1966171168
        %v457 = vunpack.c.0.s8 %v456
        %v458 = vlaneseq
        %v459 = vshrl.u32 %v458, 7
        %v460 = vsub.s32 %v457, %v459
        %v461 = vrot.slane %v439, %v460
        %v463 = vunpack.c.l.s4 1966171168
        %v464 = vunpack.c.0.s8 %v463
        %v465 = vlaneseq
        %v466 = vshrl.u32 %v465, 7
        %v467 = vsub.s32 %v464, %v466
        %v468 = vrot.slane %v440, %v467
        %v469 = vcombine.high %v447, %v447
        %v470 = vcombine.high %v454, %v454
        %v471 = vcombine.high %v461, %v461
        %v472 = vcombine.high %v468, %v468
        %v473 = vcombine.high %v345, %v345
        %v475 = vunpack.c.l.s4 1966171168
        %v476 = vunpack.c.0.s8 %v475
        %v477 = vlaneseq
        %v478 = vshrl.u32 %v477, 7
        %v479 = vsub.s32 %v476, %v478
        %v480 = vrot.slane %v345, %v479
        %v482 = vunpack.c.l.s4 1966171168
        %v483 = vunpack.c.0.s8 %v482
        %v484 = vlaneseq
        %v485 = vshrl.u32 %v484, 7
        %v486 = vsub.s32 %v483, %v485
        %v487 = vrot.slane %v473, %v486
        %v488 = vcombine.high %v480, %v480
        %v489 = vcombine.high %v487, %v487
        %v491 = vunpack.c.l.s4 1966171168
        %v492 = vunpack.c.0.s8 %v491
        %v493 = vlaneseq
        %v494 = vshrl.u32 %v493, 7
        %v495 = vsub.s32 %v492, %v494
        %v496 = vrot.slane %v480, %v495
        %v498 = vunpack.c.l.s4 1966171168
        %v499 = vunpack.c.0.s8 %v498
        %v500 = vlaneseq
        %v501 = vshrl.u32 %v500, 7
        %v502 = vsub.s32 %v499, %v501
        %v503 = vrot.slane %v487, %v502
        %v505 = vunpack.c.l.s4 1966171168
        %v506 = vunpack.c.0.s8 %v505
        %v507 = vlaneseq
        %v508 = vshrl.u32 %v507, 7
        %v509 = vsub.s32 %v506, %v508
        %v510 = vrot.slane %v488, %v509
        %v512 = vunpack.c.l.s4 1966171168
        %v513 = vunpack.c.0.s8 %v512
        %v514 = vlaneseq
        %v515 = vshrl.u32 %v514, 7
        %v516 = vsub.s32 %v513, %v515
        %v517 = vrot.slane %v489, %v516
        %v518 = vcombine.high %v496, %v496
        %v519 = vcombine.high %v503, %v503
        %v520 = vcombine.high %v510, %v510
        %v521 = vcombine.high %v517, %v517
        %v522 = vcombine.high %v346, %v346
        %v524 = vunpack.c.l.s4 1966171168
        %v525 = vunpack.c.0.s8 %v524
        %v526 = vlaneseq
        %v527 = vshrl.u32 %v526, 7
        %v528 = vsub.s32 %v525, %v527
        %v529 = vrot.slane %v346, %v528
        %v531 = vunpack.c.l.s4 1966171168
        %v532 = vunpack.c.0.s8 %v531
        %v533 = vlaneseq
        %v534 = vshrl.u32 %v533, 7
        %v535 = vsub.s32 %v532, %v534
        %v536 = vrot.slane %v522, %v535
        %v537 = vcombine.high %v529, %v529
        %v538 = vcombine.high %v536, %v536
        %v540 = vunpack.c.l.s4 1966171168
        %v541 = vunpack.c.0.s8 %v540
        %v542 = vlaneseq
        %v543 = vshrl.u32 %v542, 7
        %v544 = vsub.s32 %v541, %v543
        %v545 = vrot.slane %v529, %v544
        %v547 = vunpack.c.l.s4 1966171168
        %v548 = vunpack.c.0.s8 %v547
        %v549 = vlaneseq
        %v550 = vshrl.u32 %v549, 7
        %v551 = vsub.s32 %v548, %v550
        %v552 = vrot.slane %v536, %v551
        %v554 = vunpack.c.l.s4 1966171168
        %v555 = vunpack.c.0.s8 %v554
        %v556 = vlaneseq
        %v557 = vshrl.u32 %v556, 7
        %v558 = vsub.s32 %v555, %v557
        %v559 = vrot.slane %v537, %v558
        %v561 = vunpack.c.l.s4 1966171168
        %v562 = vunpack.c.0.s8 %v561
        %v563 = vlaneseq
        %v564 = vshrl.u32 %v563, 7
        %v565 = vsub.s32 %v562, %v564
        %v566 = vrot.slane %v538, %v565
        %v567 = vcombine.high %v545, %v545
        %v568 = vcombine.high %v552, %v552
        %v569 = vcombine.high %v559, %v559
        %v570 = vcombine.high %v566, %v566
        %v571 = vcombine.high %v347, %v347
        %v573 = vunpack.c.l.s4 1966171168
        %v574 = vunpack.c.0.s8 %v573
        %v575 = vlaneseq
        %v576 = vshrl.u32 %v575, 7
        %v577 = vsub.s32 %v574, %v576
        %v578 = vrot.slane %v347, %v577
        %v580 = vunpack.c.l.s4 1966171168
        %v581 = vunpack.c.0.s8 %v580
        %v582 = vlaneseq
        %v583 = vshrl.u32 %v582, 7
        %v584 = vsub.s32 %v581, %v583
        %v585 = vrot.slane %v571, %v584
        %v586 = vcombine.high %v578, %v578
        %v587 = vcombine.high %v585, %v585
        %v589 = vunpack.c.l.s4 1966171168
        %v590 = vunpack.c.0.s8 %v589
        %v591 = vlaneseq
        %v592 = vshrl.u32 %v591, 7
        %v593 = vsub.s32 %v590, %v592
        %v594 = vrot.slane %v578, %v593
        %v596 = vunpack.c.l.s4 1966171168
        %v597 = vunpack.c.0.s8 %v596
        %v598 = vlaneseq
        %v599 = vshrl.u32 %v598, 7
        %v600 = vsub.s32 %v597, %v599
        %v601 = vrot.slane %v585, %v600
        %v603 = vunpack.c.l.s4 1966171168
        %v604 = vunpack.c.0.s8 %v603
        %v605 = vlaneseq
        %v606 = vshrl.u32 %v605, 7
        %v607 = vsub.s32 %v604, %v606
        %v608 = vrot.slane %v586, %v607
        %v610 = vunpack.c.l.s4 1966171168
        %v611 = vunpack.c.0.s8 %v610
        %v612 = vlaneseq
        %v613 = vshrl.u32 %v612, 7
        %v614 = vsub.s32 %v611, %v613
        %v615 = vrot.slane %v587, %v614
        %v616 = vcombine.high %v594, %v594
        %v617 = vcombine.high %v601, %v601
        %v618 = vcombine.high %v608, %v608
        %v619 = vcombine.high %v615, %v615
        %v620 = vcombine.high %v348, %v348
        %v622 = vunpack.c.l.s4 1966171168
        %v623 = vunpack.c.0.s8 %v622
        %v624 = vlaneseq
        %v625 = vshrl.u32 %v624, 7
        %v626 = vsub.s32 %v623, %v625
        %v627 = vrot.slane %v348, %v626
        %v629 = vunpack.c.l.s4 1966171168
        %v630 = vunpack.c.0.s8 %v629
        %v631 = vlaneseq
        %v632 = vshrl.u32 %v631, 7
        %v633 = vsub.s32 %v630, %v632
        %v634 = vrot.slane %v620, %v633
        %v635 = vcombine.high %v627, %v627
        %v636 = vcombine.high %v634, %v634
        %v638 = vunpack.c.l.s4 1966171168
        %v639 = vunpack.c.0.s8 %v638
        %v640 = vlaneseq
        %v641 = vshrl.u32 %v640, 7
        %v642 = vsub.s32 %v639, %v641
        %v643 = vrot.slane %v627, %v642
        %v645 = vunpack.c.l.s4 1966171168
        %v646 = vunpack.c.0.s8 %v645
        %v647 = vlaneseq
        %v648 = vshrl.u32 %v647, 7
        %v649 = vsub.s32 %v646, %v648
        %v650 = vrot.slane %v634, %v649
        %v652 = vunpack.c.l.s4 1966171168
        %v653 = vunpack.c.0.s8 %v652
        %v654 = vlaneseq
        %v655 = vshrl.u32 %v654, 7
        %v656 = vsub.s32 %v653, %v655
        %v657 = vrot.slane %v635, %v656
        %v659 = vunpack.c.l.s4 1966171168
        %v660 = vunpack.c.0.s8 %v659
        %v661 = vlaneseq
        %v662 = vshrl.u32 %v661, 7
        %v663 = vsub.s32 %v660, %v662
        %v664 = vrot.slane %v636, %v663
        %v665 = vcombine.high %v643, %v643
        %v666 = vcombine.high %v650, %v650
        %v667 = vcombine.high %v657, %v657
        %v668 = vcombine.high %v664, %v664
        %v669 = vcombine.high %v349, %v349
        %v671 = vunpack.c.l.s4 1966171168
        %v672 = vunpack.c.0.s8 %v671
        %v673 = vlaneseq
        %v674 = vshrl.u32 %v673, 7
        %v675 = vsub.s32 %v672, %v674
        %v676 = vrot.slane %v349, %v675
        %v678 = vunpack.c.l.s4 1966171168
        %v679 = vunpack.c.0.s8 %v678
        %v680 = vlaneseq
        %v681 = vshrl.u32 %v680, 7
        %v682 = vsub.s32 %v679, %v681
        %v683 = vrot.slane %v669, %v682
        %v684 = vcombine.high %v676, %v676
        %v685 = vcombine.high %v683, %v683
        %v687 = vunpack.c.l.s4 1966171168
        %v688 = vunpack.c.0.s8 %v687
        %v689 = vlaneseq
        %v690 = vshrl.u32 %v689, 7
        %v691 = vsub.s32 %v688, %v690
        %v692 = vrot.slane %v676, %v691
        %v694 = vunpack.c.l.s4 1966171168
        %v695 = vunpack.c.0.s8 %v694
        %v696 = vlaneseq
        %v697 = vshrl.u32 %v696, 7
        %v698 = vsub.s32 %v695, %v697
        %v699 = vrot.slane %v683, %v698
        %v701 = vunpack.c.l.s4 1966171168
        %v702 = vunpack.c.0.s8 %v701
        %v703 = vlaneseq
        %v704 = vshrl.u32 %v703, 7
        %v705 = vsub.s32 %v702, %v704
        %v706 = vrot.slane %v684, %v705
        %v708 = vunpack.c.l.s4 1966171168
        %v709 = vunpack.c.0.s8 %v708
        %v710 = vlaneseq
        %v711 = vshrl.u32 %v710, 7
        %v712 = vsub.s32 %v709, %v711
        %v713 = vrot.slane %v685, %v712
        %v714 = vcombine.high %v692, %v692
        %v715 = vcombine.high %v699, %v699
        %v716 = vcombine.high %v706, %v706
        %v717 = vcombine.high %v713, %v713
        %v718 = vcombine.high %v350, %v350
        %v720 = vunpack.c.l.s4 1966171168
        %v721 = vunpack.c.0.s8 %v720
        %v722 = vlaneseq
        %v723 = vshrl.u32 %v722, 7
        %v724 = vsub.s32 %v721, %v723
        %v725 = vrot.slane %v350, %v724
        %v727 = vunpack.c.l.s4 1966171168
        %v728 = vunpack.c.0.s8 %v727
        %v729 = vlaneseq
        %v730 = vshrl.u32 %v729, 7
        %v731 = vsub.s32 %v728, %v730
        %v732 = vrot.slane %v718, %v731
        %v733 = vcombine.high %v725, %v725
        %v734 = vcombine.high %v732, %v732
        %v736 = vunpack.c.l.s4 1966171168
        %v737 = vunpack.c.0.s8 %v736
        %v738 = vlaneseq
        %v739 = vshrl.u32 %v738, 7
        %v740 = vsub.s32 %v737, %v739
        %v741 = vrot.slane %v725, %v740
        %v743 = vunpack.c.l.s4 1966171168
        %v744 = vunpack.c.0.s8 %v743
        %v745 = vlaneseq
        %v746 = vshrl.u32 %v745, 7
        %v747 = vsub.s32 %v744, %v746
        %v748 = vrot.slane %v732, %v747
        %v750 = vunpack.c.l.s4 1966171168
        %v751 = vunpack.c.0.s8 %v750
        %v752 = vlaneseq
        %v753 = vshrl.u32 %v752, 7
        %v754 = vsub.s32 %v751, %v753
        %v755 = vrot.slane %v733, %v754
        %v757 = vunpack.c.l.s4 1966171168
        %v758 = vunpack.c.0.s8 %v757
        %v759 = vlaneseq
        %v760 = vshrl.u32 %v759, 7
        %v761 = vsub.s32 %v758, %v760
        %v762 = vrot.slane %v734, %v761
        %v763 = vcombine.high %v741, %v741
        %v764 = vcombine.high %v748, %v748
        %v765 = vcombine.high %v755, %v755
        %v766 = vcombine.high %v762, %v762
        %v767 = vcombine.high %v351, %v351
        %v769 = vunpack.c.l.s4 1966171168
        %v770 = vunpack.c.0.s8 %v769
        %v771 = vlaneseq
        %v772 = vshrl.u32 %v771, 7
        %v773 = vsub.s32 %v770, %v772
        %v774 = vrot.slane %v351, %v773
        %v776 = vunpack.c.l.s4 1966171168
        %v777 = vunpack.c.0.s8 %v776
        %v778 = vlaneseq
        %v779 = vshrl.u32 %v778, 7
        %v780 = vsub.s32 %v777, %v779
        %v781 = vrot.slane %v767, %v780
        %v782 = vcombine.high %v774, %v774
        %v783 = vcombine.high %v781, %v781
        %v785 = vunpack.c.l.s4 1966171168
        %v786 = vunpack.c.0.s8 %v785
        %v787 = vlaneseq
        %v788 = vshrl.u32 %v787, 7
        %v789 = vsub.s32 %v786, %v788
        %v790 = vrot.slane %v774, %v789
        %v792 = vunpack.c.l.s4 1966171168
        %v793 = vunpack.c.0.s8 %v792
        %v794 = vlaneseq
        %v795 = vshrl.u32 %v794, 7
        %v796 = vsub.s32 %v793, %v795
        %v797 = vrot.slane %v781, %v796
        %v799 = vunpack.c.l.s4 1966171168
        %v800 = vunpack.c.0.s8 %v799
        %v801 = vlaneseq
        %v802 = vshrl.u32 %v801, 7
        %v803 = vsub.s32 %v800, %v802
        %v804 = vrot.slane %v782, %v803
        %v806 = vunpack.c.l.s4 1966171168
        %v807 = vunpack.c.0.s8 %v806
        %v808 = vlaneseq
        %v809 = vshrl.u32 %v808, 7
        %v810 = vsub.s32 %v807, %v809
        %v811 = vrot.slane %v783, %v810
        %v812 = vcombine.high %v790, %v790
        %v813 = vcombine.high %v797, %v797
        %v814 = vcombine.high %v804, %v804
        %v815 = vcombine.high %v811, %v811
        %v816 = vcombine.high %v352, %v352
        %v818 = vunpack.c.l.s4 1966171168
        %v819 = vunpack.c.0.s8 %v818
        %v820 = vlaneseq
        %v821 = vshrl.u32 %v820, 7
        %v822 = vsub.s32 %v819, %v821
        %v823 = vrot.slane %v352, %v822
        %v825 = vunpack.c.l.s4 1966171168
        %v826 = vunpack.c.0.s8 %v825
        %v827 = vlaneseq
        %v828 = vshrl.u32 %v827, 7
        %v829 = vsub.s32 %v826, %v828
        %v830 = vrot.slane %v816, %v829
        %v831 = vcombine.high %v823, %v823
        %v832 = vcombine.high %v830, %v830
        %v834 = vunpack.c.l.s4 1966171168
        %v835 = vunpack.c.0.s8 %v834
        %v836 = vlaneseq
        %v837 = vshrl.u32 %v836, 7
        %v838 = vsub.s32 %v835, %v837
        %v839 = vrot.slane %v823, %v838
        %v841 = vunpack.c.l.s4 1966171168
        %v842 = vunpack.c.0.s8 %v841
        %v843 = vlaneseq
        %v844 = vshrl.u32 %v843, 7
        %v845 = vsub.s32 %v842, %v844
        %v846 = vrot.slane %v830, %v845
        %v848 = vunpack.c.l.s4 1966171168
        %v849 = vunpack.c.0.s8 %v848
        %v850 = vlaneseq
        %v851 = vshrl.u32 %v850, 7
        %v852 = vsub.s32 %v849, %v851
        %v853 = vrot.slane %v831, %v852
        %v855 = vunpack.c.l.s4 1966171168
        %v856 = vunpack.c.0.s8 %v855
        %v857 = vlaneseq
        %v858 = vshrl.u32 %v857, 7
        %v859 = vsub.s32 %v856, %v858
        %v860 = vrot.slane %v832, %v859
        %v861 = vcombine.high %v839, %v839
        %v862 = vcombine.high %v846, %v846
        %v863 = vcombine.high %v853, %v853
        %v864 = vcombine.high %v860, %v860
        %v865 = vcombine.high %v353, %v353
        %v867 = vunpack.c.l.s4 1966171168
        %v868 = vunpack.c.0.s8 %v867
        %v869 = vlaneseq
        %v870 = vshrl.u32 %v869, 7
        %v871 = vsub.s32 %v868, %v870
        %v872 = vrot.slane %v353, %v871
        %v874 = vunpack.c.l.s4 1966171168
        %v875 = vunpack.c.0.s8 %v874
        %v876 = vlaneseq
        %v877 = vshrl.u32 %v876, 7
        %v878 = vsub.s32 %v875, %v877
        %v879 = vrot.slane %v865, %v878
        %v880 = vcombine.high %v872, %v872
        %v881 = vcombine.high %v879, %v879
        %v883 = vunpack.c.l.s4 1966171168
        %v884 = vunpack.c.0.s8 %v883
        %v885 = vlaneseq
        %v886 = vshrl.u32 %v885, 7
        %v887 = vsub.s32 %v884, %v886
        %v888 = vrot.slane %v872, %v887
        %v890 = vunpack.c.l.s4 1966171168
        %v891 = vunpack.c.0.s8 %v890
        %v892 = vlaneseq
        %v893 = vshrl.u32 %v892, 7
        %v894 = vsub.s32 %v891, %v893
        %v895 = vrot.slane %v879, %v894
        %v897 = vunpack.c.l.s4 1966171168
        %v898 = vunpack.c.0.s8 %v897
        %v899 = vlaneseq
        %v900 = vshrl.u32 %v899, 7
        %v901 = vsub.s32 %v898, %v900
        %v902 = vrot.slane %v880, %v901
        %v904 = vunpack.c.l.s4 1966171168
        %v905 = vunpack.c.0.s8 %v904
        %v906 = vlaneseq
        %v907 = vshrl.u32 %v906, 7
        %v908 = vsub.s32 %v905, %v907
        %v909 = vrot.slane %v881, %v908
        %v910 = vcombine.high %v888, %v888
        %v911 = vcombine.high %v895, %v895
        %v912 = vcombine.high %v902, %v902
        %v913 = vcombine.high %v909, %v909
        %v914 = vcombine.high %v354, %v354
        %v916 = vunpack.c.l.s4 1966171168
        %v917 = vunpack.c.0.s8 %v916
        %v918 = vlaneseq
        %v919 = vshrl.u32 %v918, 7
        %v920 = vsub.s32 %v917, %v919
        %v921 = vrot.slane %v354, %v920
        %v923 = vunpack.c.l.s4 1966171168
        %v924 = vunpack.c.0.s8 %v923
        %v925 = vlaneseq
        %v926 = vshrl.u32 %v925, 7
        %v927 = vsub.s32 %v924, %v926
        %v928 = vrot.slane %v914, %v927
        %v929 = vcombine.high %v921, %v921
        %v930 = vcombine.high %v928, %v928
        %v932 = vunpack.c.l.s4 1966171168
        %v933 = vunpack.c.0.s8 %v932
        %v934 = vlaneseq
        %v935 = vshrl.u32 %v934, 7
        %v936 = vsub.s32 %v933, %v935
        %v937 = vrot.slane %v921, %v936
        %v939 = vunpack.c.l.s4 1966171168
        %v940 = vunpack.c.0.s8 %v939
        %v941 = vlaneseq
        %v942 = vshrl.u32 %v941, 7
        %v943 = vsub.s32 %v940, %v942
        %v944 = vrot.slane %v928, %v943
        %v946 = vunpack.c.l.s4 1966171168
        %v947 = vunpack.c.0.s8 %v946
        %v948 = vlaneseq
        %v949 = vshrl.u32 %v948, 7
        %v950 = vsub.s32 %v947, %v949
        %v951 = vrot.slane %v929, %v950
        %v953 = vunpack.c.l.s4 1966171168
        %v954 = vunpack.c.0.s8 %v953
        %v955 = vlaneseq
        %v956 = vshrl.u32 %v955, 7
        %v957 = vsub.s32 %v954, %v956
        %v958 = vrot.slane %v930, %v957
        %v959 = vcombine.high %v937, %v937
        %v960 = vcombine.high %v944, %v944
        %v961 = vcombine.high %v951, %v951
        %v962 = vcombine.high %v958, %v958
        %v963 = vcombine.high %v355, %v355
        %v965 = vunpack.c.l.s4 1966171168
        %v966 = vunpack.c.0.s8 %v965
        %v967 = vlaneseq
        %v968 = vshrl.u32 %v967, 7
        %v969 = vsub.s32 %v966, %v968
        %v970 = vrot.slane %v355, %v969
        %v972 = vunpack.c.l.s4 1966171168
        %v973 = vunpack.c.0.s8 %v972
        %v974 = vlaneseq
        %v975 = vshrl.u32 %v974, 7
        %v976 = vsub.s32 %v973, %v975
        %v977 = vrot.slane %v963, %v976
        %v978 = vcombine.high %v970, %v970
        %v979 = vcombine.high %v977, %v977
        %v981 = vunpack.c.l.s4 1966171168
        %v982 = vunpack.c.0.s8 %v981
        %v983 = vlaneseq
        %v984 = vshrl.u32 %v983, 7
        %v985 = vsub.s32 %v982, %v984
        %v986 = vrot.slane %v970, %v985
        %v988 = vunpack.c.l.s4 1966171168
        %v989 = vunpack.c.0.s8 %v988
        %v990 = vlaneseq
        %v991 = vshrl.u32 %v990, 7
        %v992 = vsub.s32 %v989, %v991
        %v993 = vrot.slane %v977, %v992
        %v995 = vunpack.c.l.s4 1966171168
        %v996 = vunpack.c.0.s8 %v995
        %v997 = vlaneseq
        %v998 = vshrl.u32 %v997, 7
        %v999 = vsub.s32 %v996, %v998
        %v1000 = vrot.slane %v978, %v999
        %v1002 = vunpack.c.l.s4 1966171168
        %v1003 = vunpack.c.0.s8 %v1002
        %v1004 = vlaneseq
        %v1005 = vshrl.u32 %v1004, 7
        %v1006 = vsub.s32 %v1003, %v1005
        %v1007 = vrot.slane %v979, %v1006
        %v1008 = vcombine.high %v986, %v986
        %v1009 = vcombine.high %v993, %v993
        %v1010 = vcombine.high %v1000, %v1000
        %v1011 = vcombine.high %v1007, %v1007
        %v1012 = vcombine.high %v356, %v356
        %v1014 = vunpack.c.l.s4 1966171168
        %v1015 = vunpack.c.0.s8 %v1014
        %v1016 = vlaneseq
        %v1017 = vshrl.u32 %v1016, 7
        %v1018 = vsub.s32 %v1015, %v1017
        %v1019 = vrot.slane %v356, %v1018
        %v1021 = vunpack.c.l.s4 1966171168
        %v1022 = vunpack.c.0.s8 %v1021
        %v1023 = vlaneseq
        %v1024 = vshrl.u32 %v1023, 7
        %v1025 = vsub.s32 %v1022, %v1024
        %v1026 = vrot.slane %v1012, %v1025
        %v1027 = vcombine.high %v1019, %v1019
        %v1028 = vcombine.high %v1026, %v1026
        %v1030 = vunpack.c.l.s4 1966171168
        %v1031 = vunpack.c.0.s8 %v1030
        %v1032 = vlaneseq
        %v1033 = vshrl.u32 %v1032, 7
        %v1034 = vsub.s32 %v1031, %v1033
        %v1035 = vrot.slane %v1019, %v1034
        %v1037 = vunpack.c.l.s4 1966171168
        %v1038 = vunpack.c.0.s8 %v1037
        %v1039 = vlaneseq
        %v1040 = vshrl.u32 %v1039, 7
        %v1041 = vsub.s32 %v1038, %v1040
        %v1042 = vrot.slane %v1026, %v1041
        %v1044 = vunpack.c.l.s4 1966171168
        %v1045 = vunpack.c.0.s8 %v1044
        %v1046 = vlaneseq
        %v1047 = vshrl.u32 %v1046, 7
        %v1048 = vsub.s32 %v1045, %v1047
        %v1049 = vrot.slane %v1027, %v1048
        %v1051 = vunpack.c.l.s4 1966171168
        %v1052 = vunpack.c.0.s8 %v1051
        %v1053 = vlaneseq
        %v1054 = vshrl.u32 %v1053, 7
        %v1055 = vsub.s32 %v1052, %v1054
        %v1056 = vrot.slane %v1028, %v1055
        %v1057 = vcombine.high %v1035, %v1035
        %v1058 = vcombine.high %v1042, %v1042
        %v1059 = vcombine.high %v1049, %v1049
        %v1060 = vcombine.high %v1056, %v1056
        %v1061 = vcombine.high %v357, %v357
        %v1063 = vunpack.c.l.s4 1966171168
        %v1064 = vunpack.c.0.s8 %v1063
        %v1065 = vlaneseq
        %v1066 = vshrl.u32 %v1065, 7
        %v1067 = vsub.s32 %v1064, %v1066
        %v1068 = vrot.slane %v357, %v1067
        %v1070 = vunpack.c.l.s4 1966171168
        %v1071 = vunpack.c.0.s8 %v1070
        %v1072 = vlaneseq
        %v1073 = vshrl.u32 %v1072, 7
        %v1074 = vsub.s32 %v1071, %v1073
        %v1075 = vrot.slane %v1061, %v1074
        %v1076 = vcombine.high %v1068, %v1068
        %v1077 = vcombine.high %v1075, %v1075
        %v1079 = vunpack.c.l.s4 1966171168
        %v1080 = vunpack.c.0.s8 %v1079
        %v1081 = vlaneseq
        %v1082 = vshrl.u32 %v1081, 7
        %v1083 = vsub.s32 %v1080, %v1082
        %v1084 = vrot.slane %v1068, %v1083
        %v1086 = vunpack.c.l.s4 1966171168
        %v1087 = vunpack.c.0.s8 %v1086
        %v1088 = vlaneseq
        %v1089 = vshrl.u32 %v1088, 7
        %v1090 = vsub.s32 %v1087, %v1089
        %v1091 = vrot.slane %v1075, %v1090
        %v1093 = vunpack.c.l.s4 1966171168
        %v1094 = vunpack.c.0.s8 %v1093
        %v1095 = vlaneseq
        %v1096 = vshrl.u32 %v1095, 7
        %v1097 = vsub.s32 %v1094, %v1096
        %v1098 = vrot.slane %v1076, %v1097
        %v1100 = vunpack.c.l.s4 1966171168
        %v1101 = vunpack.c.0.s8 %v1100
        %v1102 = vlaneseq
        %v1103 = vshrl.u32 %v1102, 7
        %v1104 = vsub.s32 %v1101, %v1103
        %v1105 = vrot.slane %v1077, %v1104
        %v1106 = vcombine.high %v1084, %v1084
        %v1107 = vcombine.high %v1091, %v1091
        %v1108 = vcombine.high %v1098, %v1098
        %v1109 = vcombine.high %v1105, %v1105
        %v1110 = vcombine.high %v358, %v358
        %v1112 = vunpack.c.l.s4 1966171168
        %v1113 = vunpack.c.0.s8 %v1112
        %v1114 = vlaneseq
        %v1115 = vshrl.u32 %v1114, 7
        %v1116 = vsub.s32 %v1113, %v1115
        %v1117 = vrot.slane %v358, %v1116
        %v1119 = vunpack.c.l.s4 1966171168
        %v1120 = vunpack.c.0.s8 %v1119
        %v1121 = vlaneseq
        %v1122 = vshrl.u32 %v1121, 7
        %v1123 = vsub.s32 %v1120, %v1122
        %v1124 = vrot.slane %v1110, %v1123
        %v1125 = vcombine.high %v1117, %v1117
        %v1126 = vcombine.high %v1124, %v1124
        %v1128 = vunpack.c.l.s4 1966171168
        %v1129 = vunpack.c.0.s8 %v1128
        %v1130 = vlaneseq
        %v1131 = vshrl.u32 %v1130, 7
        %v1132 = vsub.s32 %v1129, %v1131
        %v1133 = vrot.slane %v1117, %v1132
        %v1135 = vunpack.c.l.s4 1966171168
        %v1136 = vunpack.c.0.s8 %v1135
        %v1137 = vlaneseq
        %v1138 = vshrl.u32 %v1137, 7
        %v1139 = vsub.s32 %v1136, %v1138
        %v1140 = vrot.slane %v1124, %v1139
        %v1142 = vunpack.c.l.s4 1966171168
        %v1143 = vunpack.c.0.s8 %v1142
        %v1144 = vlaneseq
        %v1145 = vshrl.u32 %v1144, 7
        %v1146 = vsub.s32 %v1143, %v1145
        %v1147 = vrot.slane %v1125, %v1146
        %v1149 = vunpack.c.l.s4 1966171168
        %v1150 = vunpack.c.0.s8 %v1149
        %v1151 = vlaneseq
        %v1152 = vshrl.u32 %v1151, 7
        %v1153 = vsub.s32 %v1150, %v1152
        %v1154 = vrot.slane %v1126, %v1153
        %v1155 = vcombine.high %v1133, %v1133
        %v1156 = vcombine.high %v1140, %v1140
        %v1157 = vcombine.high %v1147, %v1147
        %v1158 = vcombine.high %v1154, %v1154
        %v1159 = vlaneseq
        %v1160 = vshrl.u32 %v1159, 7
        %v1161 = vsub.s32 0, %v1160
        %v1162 = vrot.slane %v398, %v1161
        %v1163 = vlaneseq
        %v1164 = vshrl.u32 %v1163, 7
        %v1165 = vsub.s32 0, %v1164
        %v1166 = vrot.slane %v412, %v1165
        %v1167 = vlaneseq
        %v1168 = vshrl.u32 %v1167, 7
        %v1169 = vsub.s32 0, %v1168
        %v1170 = vrot.slane %v420, %v1169
        %v1171 = vlaneseq
        %v1172 = vshrl.u32 %v1171, 7
        %v1173 = vsub.s32 0, %v1172
        %v1174 = vrot.slane %v422, %v1173
        %v1175 = vlaneseq
        %v1176 = vshrl.u32 %v1175, 7
        %v1177 = vsub.s32 0, %v1176
        %v1178 = vrot.slane %v405, %v1177
        %v1179 = vlaneseq
        %v1180 = vshrl.u32 %v1179, 7
        %v1181 = vsub.s32 0, %v1180
        %v1182 = vrot.slane %v419, %v1181
        %v1183 = vlaneseq
        %v1184 = vshrl.u32 %v1183, 7
        %v1185 = vsub.s32 0, %v1184
        %v1186 = vrot.slane %v421, %v1185
        %v1187 = vlaneseq
        %v1188 = vshrl.u32 %v1187, 7
        %v1189 = vsub.s32 0, %v1188
        %v1190 = vrot.slane %v423, %v1189
        %v1191 = vlaneseq
        %v1192 = vshrl.u32 %v1191, 7
        %v1193 = vsub.s32 0, %v1192
        %v1194 = vrot.slane %v447, %v1193
        %v1195 = vlaneseq
        %v1196 = vshrl.u32 %v1195, 7
        %v1197 = vsub.s32 0, %v1196
        %v1198 = vrot.slane %v461, %v1197
        %v1199 = vlaneseq
        %v1200 = vshrl.u32 %v1199, 7
        %v1201 = vsub.s32 0, %v1200
        %v1202 = vrot.slane %v469, %v1201
        %v1203 = vlaneseq
        %v1204 = vshrl.u32 %v1203, 7
        %v1205 = vsub.s32 0, %v1204
        %v1206 = vrot.slane %v471, %v1205
        %v1207 = vlaneseq
        %v1208 = vshrl.u32 %v1207, 7
        %v1209 = vsub.s32 0, %v1208
        %v1210 = vrot.slane %v454, %v1209
        %v1211 = vlaneseq
        %v1212 = vshrl.u32 %v1211, 7
        %v1213 = vsub.s32 0, %v1212
        %v1214 = vrot.slane %v468, %v1213
        %v1215 = vlaneseq
        %v1216 = vshrl.u32 %v1215, 7
        %v1217 = vsub.s32 0, %v1216
        %v1218 = vrot.slane %v470, %v1217
        %v1219 = vlaneseq
        %v1220 = vshrl.u32 %v1219, 7
        %v1221 = vsub.s32 0, %v1220
        %v1222 = vrot.slane %v472, %v1221
        %v1223 = vlaneseq
        %v1224 = vshrl.u32 %v1223, 7
        %v1225 = vsub.s32 0, %v1224
        %v1226 = vrot.slane %v496, %v1225
        %v1227 = vlaneseq
        %v1228 = vshrl.u32 %v1227, 7
        %v1229 = vsub.s32 0, %v1228
        %v1230 = vrot.slane %v510, %v1229
        %v1231 = vlaneseq
        %v1232 = vshrl.u32 %v1231, 7
        %v1233 = vsub.s32 0, %v1232
        %v1234 = vrot.slane %v518, %v1233
        %v1235 = vlaneseq
        %v1236 = vshrl.u32 %v1235, 7
        %v1237 = vsub.s32 0, %v1236
        %v1238 = vrot.slane %v520, %v1237
        %v1239 = vlaneseq
        %v1240 = vshrl.u32 %v1239, 7
        %v1241 = vsub.s32 0, %v1240
        %v1242 = vrot.slane %v503, %v1241
        %v1243 = vlaneseq
        %v1244 = vshrl.u32 %v1243, 7
        %v1245 = vsub.s32 0, %v1244
        %v1246 = vrot.slane %v517, %v1245
        %v1247 = vlaneseq
        %v1248 = vshrl.u32 %v1247, 7
        %v1249 = vsub.s32 0, %v1248
        %v1250 = vrot.slane %v519, %v1249
        %v1251 = vlaneseq
        %v1252 = vshrl.u32 %v1251, 7
        %v1253 = vsub.s32 0, %v1252
        %v1254 = vrot.slane %v521, %v1253
        %v1255 = vlaneseq
        %v1256 = vshrl.u32 %v1255, 7
        %v1257 = vsub.s32 0, %v1256
        %v1258 = vrot.slane %v545, %v1257
        %v1259 = vlaneseq
        %v1260 = vshrl.u32 %v1259, 7
        %v1261 = vsub.s32 0, %v1260
        %v1262 = vrot.slane %v559, %v1261
        %v1263 = vlaneseq
        %v1264 = vshrl.u32 %v1263, 7
        %v1265 = vsub.s32 0, %v1264
        %v1266 = vrot.slane %v567, %v1265
        %v1267 = vlaneseq
        %v1268 = vshrl.u32 %v1267, 7
        %v1269 = vsub.s32 0, %v1268
        %v1270 = vrot.slane %v569, %v1269
        %v1271 = vlaneseq
        %v1272 = vshrl.u32 %v1271, 7
        %v1273 = vsub.s32 0, %v1272
        %v1274 = vrot.slane %v552, %v1273
        %v1275 = vlaneseq
        %v1276 = vshrl.u32 %v1275, 7
        %v1277 = vsub.s32 0, %v1276
        %v1278 = vrot.slane %v566, %v1277
        %v1279 = vlaneseq
        %v1280 = vshrl.u32 %v1279, 7
        %v1281 = vsub.s32 0, %v1280
        %v1282 = vrot.slane %v568, %v1281
        %v1283 = vlaneseq
        %v1284 = vshrl.u32 %v1283, 7
        %v1285 = vsub.s32 0, %v1284
        %v1286 = vrot.slane %v570, %v1285
        %v1287 = vlaneseq
        %v1288 = vshrl.u32 %v1287, 7
        %v1289 = vsub.s32 0, %v1288
        %v1290 = vrot.slane %v594, %v1289
        %v1291 = vlaneseq
        %v1292 = vshrl.u32 %v1291, 7
        %v1293 = vsub.s32 0, %v1292
        %v1294 = vrot.slane %v608, %v1293
        %v1295 = vlaneseq
        %v1296 = vshrl.u32 %v1295, 7
        %v1297 = vsub.s32 0, %v1296
        %v1298 = vrot.slane %v616, %v1297
        %v1299 = vlaneseq
        %v1300 = vshrl.u32 %v1299, 7
        %v1301 = vsub.s32 0, %v1300
        %v1302 = vrot.slane %v618, %v1301
        %v1303 = vlaneseq
        %v1304 = vshrl.u32 %v1303, 7
        %v1305 = vsub.s32 0, %v1304
        %v1306 = vrot.slane %v601, %v1305
        %v1307 = vlaneseq
        %v1308 = vshrl.u32 %v1307, 7
        %v1309 = vsub.s32 0, %v1308
        %v1310 = vrot.slane %v615, %v1309
        %v1311 = vlaneseq
        %v1312 = vshrl.u32 %v1311, 7
        %v1313 = vsub.s32 0, %v1312
        %v1314 = vrot.slane %v617, %v1313
        %v1315 = vlaneseq
        %v1316 = vshrl.u32 %v1315, 7
        %v1317 = vsub.s32 0, %v1316
        %v1318 = vrot.slane %v619, %v1317
        %v1319 = vlaneseq
        %v1320 = vshrl.u32 %v1319, 7
        %v1321 = vsub.s32 0, %v1320
        %v1322 = vrot.slane %v643, %v1321
        %v1323 = vlaneseq
        %v1324 = vshrl.u32 %v1323, 7
        %v1325 = vsub.s32 0, %v1324
        %v1326 = vrot.slane %v657, %v1325
        %v1327 = vlaneseq
        %v1328 = vshrl.u32 %v1327, 7
        %v1329 = vsub.s32 0, %v1328
        %v1330 = vrot.slane %v665, %v1329
        %v1331 = vlaneseq
        %v1332 = vshrl.u32 %v1331, 7
        %v1333 = vsub.s32 0, %v1332
        %v1334 = vrot.slane %v667, %v1333
        %v1335 = vlaneseq
        %v1336 = vshrl.u32 %v1335, 7
        %v1337 = vsub.s32 0, %v1336
        %v1338 = vrot.slane %v650, %v1337
        %v1339 = vlaneseq
        %v1340 = vshrl.u32 %v1339, 7
        %v1341 = vsub.s32 0, %v1340
        %v1342 = vrot.slane %v664, %v1341
        %v1343 = vlaneseq
        %v1344 = vshrl.u32 %v1343, 7
        %v1345 = vsub.s32 0, %v1344
        %v1346 = vrot.slane %v666, %v1345
        %v1347 = vlaneseq
        %v1348 = vshrl.u32 %v1347, 7
        %v1349 = vsub.s32 0, %v1348
        %v1350 = vrot.slane %v668, %v1349
        %v1351 = vlaneseq
        %v1352 = vshrl.u32 %v1351, 7
        %v1353 = vsub.s32 0, %v1352
        %v1354 = vrot.slane %v692, %v1353
        %v1355 = vlaneseq
        %v1356 = vshrl.u32 %v1355, 7
        %v1357 = vsub.s32 0, %v1356
        %v1358 = vrot.slane %v706, %v1357
        %v1359 = vlaneseq
        %v1360 = vshrl.u32 %v1359, 7
        %v1361 = vsub.s32 0, %v1360
        %v1362 = vrot.slane %v714, %v1361
        %v1363 = vlaneseq
        %v1364 = vshrl.u32 %v1363, 7
        %v1365 = vsub.s32 0, %v1364
        %v1366 = vrot.slane %v716, %v1365
        %v1367 = vlaneseq
        %v1368 = vshrl.u32 %v1367, 7
        %v1369 = vsub.s32 0, %v1368
        %v1370 = vrot.slane %v699, %v1369
        %v1371 = vlaneseq
        %v1372 = vshrl.u32 %v1371, 7
        %v1373 = vsub.s32 0, %v1372
        %v1374 = vrot.slane %v713, %v1373
        %v1375 = vlaneseq
        %v1376 = vshrl.u32 %v1375, 7
        %v1377 = vsub.s32 0, %v1376
        %v1378 = vrot.slane %v715, %v1377
        %v1379 = vlaneseq
        %v1380 = vshrl.u32 %v1379, 7
        %v1381 = vsub.s32 0, %v1380
        %v1382 = vrot.slane %v717, %v1381
        %v1383 = vlaneseq
        %v1384 = vshrl.u32 %v1383, 7
        %v1385 = vsub.s32 0, %v1384
        %v1386 = vrot.slane %v741, %v1385
        %v1387 = vlaneseq
        %v1388 = vshrl.u32 %v1387, 7
        %v1389 = vsub.s32 0, %v1388
        %v1390 = vrot.slane %v755, %v1389
        %v1391 = vlaneseq
        %v1392 = vshrl.u32 %v1391, 7
        %v1393 = vsub.s32 0, %v1392
        %v1394 = vrot.slane %v763, %v1393
        %v1395 = vlaneseq
        %v1396 = vshrl.u32 %v1395, 7
        %v1397 = vsub.s32 0, %v1396
        %v1398 = vrot.slane %v765, %v1397
        %v1399 = vlaneseq
        %v1400 = vshrl.u32 %v1399, 7
        %v1401 = vsub.s32 0, %v1400
        %v1402 = vrot.slane %v748, %v1401
        %v1403 = vlaneseq
        %v1404 = vshrl.u32 %v1403, 7
        %v1405 = vsub.s32 0, %v1404
        %v1406 = vrot.slane %v762, %v1405
        %v1407 = vlaneseq
        %v1408 = vshrl.u32 %v1407, 7
        %v1409 = vsub.s32 0, %v1408
        %v1410 = vrot.slane %v764, %v1409
        %v1411 = vlaneseq
        %v1412 = vshrl.u32 %v1411, 7
        %v1413 = vsub.s32 0, %v1412
        %v1414 = vrot.slane %v766, %v1413
        %v1415 = vlaneseq
        %v1416 = vshrl.u32 %v1415, 7
        %v1417 = vsub.s32 0, %v1416
        %v1418 = vrot.slane %v790, %v1417
        %v1419 = vlaneseq
        %v1420 = vshrl.u32 %v1419, 7
        %v1421 = vsub.s32 0, %v1420
        %v1422 = vrot.slane %v804, %v1421
        %v1423 = vlaneseq
        %v1424 = vshrl.u32 %v1423, 7
        %v1425 = vsub.s32 0, %v1424
        %v1426 = vrot.slane %v812, %v1425
        %v1427 = vlaneseq
        %v1428 = vshrl.u32 %v1427, 7
        %v1429 = vsub.s32 0, %v1428
        %v1430 = vrot.slane %v814, %v1429
        %v1431 = vlaneseq
        %v1432 = vshrl.u32 %v1431, 7
        %v1433 = vsub.s32 0, %v1432
        %v1434 = vrot.slane %v797, %v1433
        %v1435 = vlaneseq
        %v1436 = vshrl.u32 %v1435, 7
        %v1437 = vsub.s32 0, %v1436
        %v1438 = vrot.slane %v811, %v1437
        %v1439 = vlaneseq
        %v1440 = vshrl.u32 %v1439, 7
        %v1441 = vsub.s32 0, %v1440
        %v1442 = vrot.slane %v813, %v1441
        %v1443 = vlaneseq
        %v1444 = vshrl.u32 %v1443, 7
        %v1445 = vsub.s32 0, %v1444
        %v1446 = vrot.slane %v815, %v1445
        %v1447 = vlaneseq
        %v1448 = vshrl.u32 %v1447, 7
        %v1449 = vsub.s32 0, %v1448
        %v1450 = vrot.slane %v839, %v1449
        %v1451 = vlaneseq
        %v1452 = vshrl.u32 %v1451, 7
        %v1453 = vsub.s32 0, %v1452
        %v1454 = vrot.slane %v853, %v1453
        %v1455 = vlaneseq
        %v1456 = vshrl.u32 %v1455, 7
        %v1457 = vsub.s32 0, %v1456
        %v1458 = vrot.slane %v861, %v1457
        %v1459 = vlaneseq
        %v1460 = vshrl.u32 %v1459, 7
        %v1461 = vsub.s32 0, %v1460
        %v1462 = vrot.slane %v863, %v1461
        %v1463 = vlaneseq
        %v1464 = vshrl.u32 %v1463, 7
        %v1465 = vsub.s32 0, %v1464
        %v1466 = vrot.slane %v846, %v1465
        %v1467 = vlaneseq
        %v1468 = vshrl.u32 %v1467, 7
        %v1469 = vsub.s32 0, %v1468
        %v1470 = vrot.slane %v860, %v1469
        %v1471 = vlaneseq
        %v1472 = vshrl.u32 %v1471, 7
        %v1473 = vsub.s32 0, %v1472
        %v1474 = vrot.slane %v862, %v1473
        %v1475 = vlaneseq
        %v1476 = vshrl.u32 %v1475, 7
        %v1477 = vsub.s32 0, %v1476
        %v1478 = vrot.slane %v864, %v1477
        %v1479 = vlaneseq
        %v1480 = vshrl.u32 %v1479, 7
        %v1481 = vsub.s32 0, %v1480
        %v1482 = vrot.slane %v888, %v1481
        %v1483 = vlaneseq
        %v1484 = vshrl.u32 %v1483, 7
        %v1485 = vsub.s32 0, %v1484
        %v1486 = vrot.slane %v902, %v1485
        %v1487 = vlaneseq
        %v1488 = vshrl.u32 %v1487, 7
        %v1489 = vsub.s32 0, %v1488
        %v1490 = vrot.slane %v910, %v1489
        %v1491 = vlaneseq
        %v1492 = vshrl.u32 %v1491, 7
        %v1493 = vsub.s32 0, %v1492
        %v1494 = vrot.slane %v912, %v1493
        %v1495 = vlaneseq
        %v1496 = vshrl.u32 %v1495, 7
        %v1497 = vsub.s32 0, %v1496
        %v1498 = vrot.slane %v895, %v1497
        %v1499 = vlaneseq
        %v1500 = vshrl.u32 %v1499, 7
        %v1501 = vsub.s32 0, %v1500
        %v1502 = vrot.slane %v909, %v1501
        %v1503 = vlaneseq
        %v1504 = vshrl.u32 %v1503, 7
        %v1505 = vsub.s32 0, %v1504
        %v1506 = vrot.slane %v911, %v1505
        %v1507 = vlaneseq
        %v1508 = vshrl.u32 %v1507, 7
        %v1509 = vsub.s32 0, %v1508
        %v1510 = vrot.slane %v913, %v1509
        %v1511 = vlaneseq
        %v1512 = vshrl.u32 %v1511, 7
        %v1513 = vsub.s32 0, %v1512
        %v1514 = vrot.slane %v937, %v1513
        %v1515 = vlaneseq
        %v1516 = vshrl.u32 %v1515, 7
        %v1517 = vsub.s32 0, %v1516
        %v1518 = vrot.slane %v951, %v1517
        %v1519 = vlaneseq
        %v1520 = vshrl.u32 %v1519, 7
        %v1521 = vsub.s32 0, %v1520
        %v1522 = vrot.slane %v959, %v1521
        %v1523 = vlaneseq
        %v1524 = vshrl.u32 %v1523, 7
        %v1525 = vsub.s32 0, %v1524
        %v1526 = vrot.slane %v961, %v1525
        %v1527 = vlaneseq
        %v1528 = vshrl.u32 %v1527, 7
        %v1529 = vsub.s32 0, %v1528
        %v1530 = vrot.slane %v944, %v1529
        %v1531 = vlaneseq
        %v1532 = vshrl.u32 %v1531, 7
        %v1533 = vsub.s32 0, %v1532
        %v1534 = vrot.slane %v958, %v1533
        %v1535 = vlaneseq
        %v1536 = vshrl.u32 %v1535, 7
        %v1537 = vsub.s32 0, %v1536
        %v1538 = vrot.slane %v960, %v1537
        %v1539 = vlaneseq
        %v1540 = vshrl.u32 %v1539, 7
        %v1541 = vsub.s32 0, %v1540
        %v1542 = vrot.slane %v962, %v1541
        %v1543 = vlaneseq
        %v1544 = vshrl.u32 %v1543, 7
        %v1545 = vsub.s32 0, %v1544
        %v1546 = vrot.slane %v986, %v1545
        %v1547 = vlaneseq
        %v1548 = vshrl.u32 %v1547, 7
        %v1549 = vsub.s32 0, %v1548
        %v1550 = vrot.slane %v1000, %v1549
        %v1551 = vlaneseq
        %v1552 = vshrl.u32 %v1551, 7
        %v1553 = vsub.s32 0, %v1552
        %v1554 = vrot.slane %v1008, %v1553
        %v1555 = vlaneseq
        %v1556 = vshrl.u32 %v1555, 7
        %v1557 = vsub.s32 0, %v1556
        %v1558 = vrot.slane %v1010, %v1557
        %v1559 = vlaneseq
        %v1560 = vshrl.u32 %v1559, 7
        %v1561 = vsub.s32 0, %v1560
        %v1562 = vrot.slane %v993, %v1561
        %v1563 = vlaneseq
        %v1564 = vshrl.u32 %v1563, 7
        %v1565 = vsub.s32 0, %v1564
        %v1566 = vrot.slane %v1007, %v1565
        %v1567 = vlaneseq
        %v1568 = vshrl.u32 %v1567, 7
        %v1569 = vsub.s32 0, %v1568
        %v1570 = vrot.slane %v1009, %v1569
        %v1571 = vlaneseq
        %v1572 = vshrl.u32 %v1571, 7
        %v1573 = vsub.s32 0, %v1572
        %v1574 = vrot.slane %v1011, %v1573
        %v1575 = vlaneseq
        %v1576 = vshrl.u32 %v1575, 7
        %v1577 = vsub.s32 0, %v1576
        %v1578 = vrot.slane %v1035, %v1577
        %v1579 = vlaneseq
        %v1580 = vshrl.u32 %v1579, 7
        %v1581 = vsub.s32 0, %v1580
        %v1582 = vrot.slane %v1049, %v1581
        %v1583 = vlaneseq
        %v1584 = vshrl.u32 %v1583, 7
        %v1585 = vsub.s32 0, %v1584
        %v1586 = vrot.slane %v1057, %v1585
        %v1587 = vlaneseq
        %v1588 = vshrl.u32 %v1587, 7
        %v1589 = vsub.s32 0, %v1588
        %v1590 = vrot.slane %v1059, %v1589
        %v1591 = vlaneseq
        %v1592 = vshrl.u32 %v1591, 7
        %v1593 = vsub.s32 0, %v1592
        %v1594 = vrot.slane %v1042, %v1593
        %v1595 = vlaneseq
        %v1596 = vshrl.u32 %v1595, 7
        %v1597 = vsub.s32 0, %v1596
        %v1598 = vrot.slane %v1056, %v1597
        %v1599 = vlaneseq
        %v1600 = vshrl.u32 %v1599, 7
        %v1601 = vsub.s32 0, %v1600
        %v1602 = vrot.slane %v1058, %v1601
        %v1603 = vlaneseq
        %v1604 = vshrl.u32 %v1603, 7
        %v1605 = vsub.s32 0, %v1604
        %v1606 = vrot.slane %v1060, %v1605
        %v1607 = vlaneseq
        %v1608 = vshrl.u32 %v1607, 7
        %v1609 = vsub.s32 0, %v1608
        %v1610 = vrot.slane %v1084, %v1609
        %v1611 = vlaneseq
        %v1612 = vshrl.u32 %v1611, 7
        %v1613 = vsub.s32 0, %v1612
        %v1614 = vrot.slane %v1098, %v1613
        %v1615 = vlaneseq
        %v1616 = vshrl.u32 %v1615, 7
        %v1617 = vsub.s32 0, %v1616
        %v1618 = vrot.slane %v1106, %v1617
        %v1619 = vlaneseq
        %v1620 = vshrl.u32 %v1619, 7
        %v1621 = vsub.s32 0, %v1620
        %v1622 = vrot.slane %v1108, %v1621
        %v1623 = vlaneseq
        %v1624 = vshrl.u32 %v1623, 7
        %v1625 = vsub.s32 0, %v1624
        %v1626 = vrot.slane %v1091, %v1625
        %v1627 = vlaneseq
        %v1628 = vshrl.u32 %v1627, 7
        %v1629 = vsub.s32 0, %v1628
        %v1630 = vrot.slane %v1105, %v1629
        %v1631 = vlaneseq
        %v1632 = vshrl.u32 %v1631, 7
        %v1633 = vsub.s32 0, %v1632
        %v1634 = vrot.slane %v1107, %v1633
        %v1635 = vlaneseq
        %v1636 = vshrl.u32 %v1635, 7
        %v1637 = vsub.s32 0, %v1636
        %v1638 = vrot.slane %v1109, %v1637
        %v1639 = vlaneseq
        %v1640 = vshrl.u32 %v1639, 7
        %v1641 = vsub.s32 0, %v1640
        %v1642 = vrot.slane %v1133, %v1641
        %v1643 = vlaneseq
        %v1644 = vshrl.u32 %v1643, 7
        %v1645 = vsub.s32 0, %v1644
        %v1646 = vrot.slane %v1147, %v1645
        %v1647 = vlaneseq
        %v1648 = vshrl.u32 %v1647, 7
        %v1649 = vsub.s32 0, %v1648
        %v1650 = vrot.slane %v1155, %v1649
        %v1651 = vlaneseq
        %v1652 = vshrl.u32 %v1651, 7
        %v1653 = vsub.s32 0, %v1652
        %v1654 = vrot.slane %v1157, %v1653
        %v1655 = vlaneseq
        %v1656 = vshrl.u32 %v1655, 7
        %v1657 = vsub.s32 0, %v1656
        %v1658 = vrot.slane %v1140, %v1657
        %v1659 = vlaneseq
        %v1660 = vshrl.u32 %v1659, 7
        %v1661 = vsub.s32 0, %v1660
        %v1662 = vrot.slane %v1154, %v1661
        %v1663 = vlaneseq
        %v1664 = vshrl.u32 %v1663, 7
        %v1665 = vsub.s32 0, %v1664
        %v1666 = vrot.slane %v1156, %v1665
        %v1667 = vlaneseq
        %v1668 = vshrl.u32 %v1667, 7
        %v1669 = vsub.s32 0, %v1668
        %v1670 = vrot.slane %v1158, %v1669
        %v1799 = vadd.f32 %v215, %v1162
        %v1800 = vadd.f32 %v216, %v1166
        %v1801 = vadd.f32 %v217, %v1170
        %v1802 = vadd.f32 %v218, %v1174
        %v1803 = vadd.f32 %v219, %v1178
        %v1804 = vadd.f32 %v220, %v1182
        %v1805 = vadd.f32 %v221, %v1186
        %v1806 = vadd.f32 %v222, %v1190
        %v1807 = vadd.f32 %v223, %v1194
        %v1808 = vadd.f32 %v224, %v1198
        %v1809 = vadd.f32 %v225, %v1202
        %v1810 = vadd.f32 %v226, %v1206
        %v1811 = vadd.f32 %v227, %v1210
        %v1812 = vadd.f32 %v228, %v1214
        %v1813 = vadd.f32 %v229, %v1218
        %v1814 = vadd.f32 %v230, %v1222
        %v1815 = vadd.f32 %v231, %v1226
        %v1816 = vadd.f32 %v232, %v1230
        %v1817 = vadd.f32 %v233, %v1234
        %v1818 = vadd.f32 %v234, %v1238
        %v1819 = vadd.f32 %v235, %v1242
        %v1820 = vadd.f32 %v236, %v1246
        %v1821 = vadd.f32 %v237, %v1250
        %v1822 = vadd.f32 %v238, %v1254
        %v1823 = vadd.f32 %v239, %v1258
        %v1824 = vadd.f32 %v240, %v1262
        %v1825 = vadd.f32 %v241, %v1266
        %v1826 = vadd.f32 %v242, %v1270
        %v1827 = vadd.f32 %v243, %v1274
        %v1828 = vadd.f32 %v244, %v1278
        %v1829 = vadd.f32 %v245, %v1282
        %v1830 = vadd.f32 %v246, %v1286
        %v1831 = vadd.f32 %v247, %v1290
        %v1832 = vadd.f32 %v248, %v1294
        %v1833 = vadd.f32 %v249, %v1298
        %v1834 = vadd.f32 %v250, %v1302
        %v1835 = vadd.f32 %v251, %v1306
        %v1836 = vadd.f32 %v252, %v1310
        %v1837 = vadd.f32 %v253, %v1314
        %v1838 = vadd.f32 %v254, %v1318
        %v1839 = vadd.f32 %v255, %v1322
        %v1840 = vadd.f32 %v256, %v1326
        %v1841 = vadd.f32 %v257, %v1330
        %v1842 = vadd.f32 %v258, %v1334
        %v1843 = vadd.f32 %v259, %v1338
        %v1844 = vadd.f32 %v260, %v1342
        %v1845 = vadd.f32 %v261, %v1346
        %v1846 = vadd.f32 %v262, %v1350
        %v1847 = vadd.f32 %v263, %v1354
        %v1848 = vadd.f32 %v264, %v1358
        %v1849 = vadd.f32 %v265, %v1362
        %v1850 = vadd.f32 %v266, %v1366
        %v1851 = vadd.f32 %v267, %v1370
        %v1852 = vadd.f32 %v268, %v1374
        %v1853 = vadd.f32 %v269, %v1378
        %v1854 = vadd.f32 %v270, %v1382
        %v1855 = vadd.f32 %v271, %v1386
        %v1856 = vadd.f32 %v272, %v1390
        %v1857 = vadd.f32 %v273, %v1394
        %v1858 = vadd.f32 %v274, %v1398
        %v1859 = vadd.f32 %v275, %v1402
        %v1860 = vadd.f32 %v276, %v1406
        %v1861 = vadd.f32 %v277, %v1410
        %v1862 = vadd.f32 %v278, %v1414
        %v1863 = vadd.f32 %v279, %v1418
        %v1864 = vadd.f32 %v280, %v1422
        %v1865 = vadd.f32 %v281, %v1426
        %v1866 = vadd.f32 %v282, %v1430
        %v1867 = vadd.f32 %v283, %v1434
        %v1868 = vadd.f32 %v284, %v1438
        %v1869 = vadd.f32 %v285, %v1442
        %v1870 = vadd.f32 %v286, %v1446
        %v1871 = vadd.f32 %v287, %v1450
        %v1872 = vadd.f32 %v288, %v1454
        %v1873 = vadd.f32 %v289, %v1458
        %v1874 = vadd.f32 %v290, %v1462
        %v1875 = vadd.f32 %v291, %v1466
        %v1876 = vadd.f32 %v292, %v1470
        %v1877 = vadd.f32 %v293, %v1474
        %v1878 = vadd.f32 %v294, %v1478
        %v1879 = vadd.f32 %v295, %v1482
        %v1880 = vadd.f32 %v296, %v1486
        %v1881 = vadd.f32 %v297, %v1490
        %v1882 = vadd.f32 %v298, %v1494
        %v1883 = vadd.f32 %v299, %v1498
        %v1884 = vadd.f32 %v300, %v1502
        %v1885 = vadd.f32 %v301, %v1506
        %v1886 = vadd.f32 %v302, %v1510
        %v1887 = vadd.f32 %v303, %v1514
        %v1888 = vadd.f32 %v304, %v1518
        %v1889 = vadd.f32 %v305, %v1522
        %v1890 = vadd.f32 %v306, %v1526
        %v1891 = vadd.f32 %v307, %v1530
        %v1892 = vadd.f32 %v308, %v1534
        %v1893 = vadd.f32 %v309, %v1538
        %v1894 = vadd.f32 %v310, %v1542
        %v1895 = vadd.f32 %v311, %v1546
        %v1896 = vadd.f32 %v312, %v1550
        %v1897 = vadd.f32 %v313, %v1554
        %v1898 = vadd.f32 %v314, %v1558
        %v1899 = vadd.f32 %v315, %v1562
        %v1900 = vadd.f32 %v316, %v1566
        %v1901 = vadd.f32 %v317, %v1570
        %v1902 = vadd.f32 %v318, %v1574
        %v1903 = vadd.f32 %v319, %v1578
        %v1904 = vadd.f32 %v320, %v1582
        %v1905 = vadd.f32 %v321, %v1586
        %v1906 = vadd.f32 %v322, %v1590
        %v1907 = vadd.f32 %v323, %v1594
        %v1908 = vadd.f32 %v324, %v1598
        %v1909 = vadd.f32 %v325, %v1602
        %v1910 = vadd.f32 %v326, %v1606
        %v1911 = vadd.f32 %v327, %v1610
        %v1912 = vadd.f32 %v328, %v1614
        %v1913 = vadd.f32 %v329, %v1618
        %v1914 = vadd.f32 %v330, %v1622
        %v1915 = vadd.f32 %v331, %v1626
        %v1916 = vadd.f32 %v332, %v1630
        %v1917 = vadd.f32 %v333, %v1634
        %v1918 = vadd.f32 %v334, %v1638
        %v1919 = vadd.f32 %v335, %v1642
        %v1920 = vadd.f32 %v336, %v1646
        %v1921 = vadd.f32 %v337, %v1650
        %v1922 = vadd.f32 %v338, %v1654
        %v1923 = vadd.f32 %v339, %v1658
        %v1924 = vadd.f32 %v340, %v1662
        %v1925 = vadd.f32 %v341, %v1666
        %v1926 = vadd.f32 %v342, %v1670
        %1927 = vst [vmem:[%s207] sm:$0xff] %v1799
        %1928 = vst [vmem:[%s207 + $0x8] sm:$0xff] %v1800
        %1929 = vst [vmem:[%s207 + $0x10] sm:$0xff] %v1801
        %1930 = vst [vmem:[%s207 + $0x18] sm:$0xff] %v1802
        %1931 = vst [vmem:[%s207 + $0x20] sm:$0xff] %v1803
        %1932 = vst [vmem:[%s207 + $0x28] sm:$0xff] %v1804
        %1933 = vst [vmem:[%s207 + $0x30] sm:$0xff] %v1805
        %1934 = vst [vmem:[%s207 + $0x38] sm:$0xff] %v1806
        %1935 = vst [vmem:[%s207 + $0x40] sm:$0xff] %v1807
        %1936 = vst [vmem:[%s207 + $0x48] sm:$0xff] %v1808
        %1937 = vst [vmem:[%s207 + $0x50] sm:$0xff] %v1809
        %1938 = vst [vmem:[%s207 + $0x58] sm:$0xff] %v1810
        %1939 = vst [vmem:[%s207 + $0x60] sm:$0xff] %v1811
        %1940 = vst [vmem:[%s207 + $0x68] sm:$0xff] %v1812
        %1941 = vst [vmem:[%s207 + $0x70] sm:$0xff] %v1813
        %1942 = vst [vmem:[%s207 + $0x78] sm:$0xff] %v1814
        %1943 = vst [vmem:[%s207 + $0x80] sm:$0xff] %v1815
        %1944 = vst [vmem:[%s207 + $0x88] sm:$0xff] %v1816
        %1945 = vst [vmem:[%s207 + $0x90] sm:$0xff] %v1817
        %1946 = vst [vmem:[%s207 + $0x98] sm:$0xff] %v1818
        %1947 = vst [vmem:[%s207 + $0xa0] sm:$0xff] %v1819
        %1948 = vst [vmem:[%s207 + $0xa8] sm:$0xff] %v1820
        %1949 = vst [vmem:[%s207 + $0xb0] sm:$0xff] %v1821
        %1950 = vst [vmem:[%s207 + $0xb8] sm:$0xff] %v1822
        %1951 = vst [vmem:[%s207 + $0xc0] sm:$0xff] %v1823
        %1952 = vst [vmem:[%s207 + $0xc8] sm:$0xff] %v1824
        %1953 = vst [vmem:[%s207 + $0xd0] sm:$0xff] %v1825
        %1954 = vst [vmem:[%s207 + $0xd8] sm:$0xff] %v1826
        %1955 = vst [vmem:[%s207 + $0xe0] sm:$0xff] %v1827
        %1956 = vst [vmem:[%s207 + $0xe8] sm:$0xff] %v1828
        %1957 = vst [vmem:[%s207 + $0xf0] sm:$0xff] %v1829
        %1958 = vst [vmem:[%s207 + $0xf8] sm:$0xff] %v1830
        %1959 = vst [vmem:[%s207 + $0x100] sm:$0xff] %v1831
        %1960 = vst [vmem:[%s207 + $0x108] sm:$0xff] %v1832
        %1961 = vst [vmem:[%s207 + $0x110] sm:$0xff] %v1833
        %1962 = vst [vmem:[%s207 + $0x118] sm:$0xff] %v1834
        %1963 = vst [vmem:[%s207 + $0x120] sm:$0xff] %v1835
        %1964 = vst [vmem:[%s207 + $0x128] sm:$0xff] %v1836
        %1965 = vst [vmem:[%s207 + $0x130] sm:$0xff] %v1837
        %1966 = vst [vmem:[%s207 + $0x138] sm:$0xff] %v1838
        %1967 = vst [vmem:[%s207 + $0x140] sm:$0xff] %v1839
        %1968 = vst [vmem:[%s207 + $0x148] sm:$0xff] %v1840
        %1969 = vst [vmem:[%s207 + $0x150] sm:$0xff] %v1841
        %1970 = vst [vmem:[%s207 + $0x158] sm:$0xff] %v1842
        %1971 = vst [vmem:[%s207 + $0x160] sm:$0xff] %v1843
        %1972 = vst [vmem:[%s207 + $0x168] sm:$0xff] %v1844
        %1973 = vst [vmem:[%s207 + $0x170] sm:$0xff] %v1845
        %1974 = vst [vmem:[%s207 + $0x178] sm:$0xff] %v1846
        %1975 = vst [vmem:[%s207 + $0x180] sm:$0xff] %v1847
        %1976 = vst [vmem:[%s207 + $0x188] sm:$0xff] %v1848
        %1977 = vst [vmem:[%s207 + $0x190] sm:$0xff] %v1849
        %1978 = vst [vmem:[%s207 + $0x198] sm:$0xff] %v1850
        %1979 = vst [vmem:[%s207 + $0x1a0] sm:$0xff] %v1851
        %1980 = vst [vmem:[%s207 + $0x1a8] sm:$0xff] %v1852
        %1981 = vst [vmem:[%s207 + $0x1b0] sm:$0xff] %v1853
        %1982 = vst [vmem:[%s207 + $0x1b8] sm:$0xff] %v1854
        %1983 = vst [vmem:[%s207 + $0x1c0] sm:$0xff] %v1855
        %1984 = vst [vmem:[%s207 + $0x1c8] sm:$0xff] %v1856
        %1985 = vst [vmem:[%s207 + $0x1d0] sm:$0xff] %v1857
        %1986 = vst [vmem:[%s207 + $0x1d8] sm:$0xff] %v1858
        %1987 = vst [vmem:[%s207 + $0x1e0] sm:$0xff] %v1859
        %1988 = vst [vmem:[%s207 + $0x1e8] sm:$0xff] %v1860
        %1989 = vst [vmem:[%s207 + $0x1f0] sm:$0xff] %v1861
        %1990 = vst [vmem:[%s207 + $0x1f8] sm:$0xff] %v1862
        %1991 = vst [vmem:[%s207 + $0x200] sm:$0xff] %v1863
        %1992 = vst [vmem:[%s207 + $0x208] sm:$0xff] %v1864
        %1993 = vst [vmem:[%s207 + $0x210] sm:$0xff] %v1865
        %1994 = vst [vmem:[%s207 + $0x218] sm:$0xff] %v1866
        %1995 = vst [vmem:[%s207 + $0x220] sm:$0xff] %v1867
        %1996 = vst [vmem:[%s207 + $0x228] sm:$0xff] %v1868
        %1997 = vst [vmem:[%s207 + $0x230] sm:$0xff] %v1869
        %1998 = vst [vmem:[%s207 + $0x238] sm:$0xff] %v1870
        %1999 = vst [vmem:[%s207 + $0x240] sm:$0xff] %v1871
        %2000 = vst [vmem:[%s207 + $0x248] sm:$0xff] %v1872
        %2001 = vst [vmem:[%s207 + $0x250] sm:$0xff] %v1873
        %2002 = vst [vmem:[%s207 + $0x258] sm:$0xff] %v1874
        %2003 = vst [vmem:[%s207 + $0x260] sm:$0xff] %v1875
        %2004 = vst [vmem:[%s207 + $0x268] sm:$0xff] %v1876
        %2005 = vst [vmem:[%s207 + $0x270] sm:$0xff] %v1877
        %2006 = vst [vmem:[%s207 + $0x278] sm:$0xff] %v1878
        %2007 = vst [vmem:[%s207 + $0x280] sm:$0xff] %v1879
        %2008 = vst [vmem:[%s207 + $0x288] sm:$0xff] %v1880
        %2009 = vst [vmem:[%s207 + $0x290] sm:$0xff] %v1881
        %2010 = vst [vmem:[%s207 + $0x298] sm:$0xff] %v1882
        %2011 = vst [vmem:[%s207 + $0x2a0] sm:$0xff] %v1883
        %2012 = vst [vmem:[%s207 + $0x2a8] sm:$0xff] %v1884
        %2013 = vst [vmem:[%s207 + $0x2b0] sm:$0xff] %v1885
        %2014 = vst [vmem:[%s207 + $0x2b8] sm:$0xff] %v1886
        %2015 = vst [vmem:[%s207 + $0x2c0] sm:$0xff] %v1887
        %2016 = vst [vmem:[%s207 + $0x2c8] sm:$0xff] %v1888
        %2017 = vst [vmem:[%s207 + $0x2d0] sm:$0xff] %v1889
        %2018 = vst [vmem:[%s207 + $0x2d8] sm:$0xff] %v1890
        %2019 = vst [vmem:[%s207 + $0x2e0] sm:$0xff] %v1891
        %2020 = vst [vmem:[%s207 + $0x2e8] sm:$0xff] %v1892
        %2021 = vst [vmem:[%s207 + $0x2f0] sm:$0xff] %v1893
        %2022 = vst [vmem:[%s207 + $0x2f8] sm:$0xff] %v1894
        %2023 = vst [vmem:[%s207 + $0x300] sm:$0xff] %v1895
        %2024 = vst [vmem:[%s207 + $0x308] sm:$0xff] %v1896
        %2025 = vst [vmem:[%s207 + $0x310] sm:$0xff] %v1897
        %2026 = vst [vmem:[%s207 + $0x318] sm:$0xff] %v1898
        %2027 = vst [vmem:[%s207 + $0x320] sm:$0xff] %v1899
        %2028 = vst [vmem:[%s207 + $0x328] sm:$0xff] %v1900
        %2029 = vst [vmem:[%s207 + $0x330] sm:$0xff] %v1901
        %2030 = vst [vmem:[%s207 + $0x338] sm:$0xff] %v1902
        %2031 = vst [vmem:[%s207 + $0x340] sm:$0xff] %v1903
        %2032 = vst [vmem:[%s207 + $0x348] sm:$0xff] %v1904
        %2033 = vst [vmem:[%s207 + $0x350] sm:$0xff] %v1905
        %2034 = vst [vmem:[%s207 + $0x358] sm:$0xff] %v1906
        %2035 = vst [vmem:[%s207 + $0x360] sm:$0xff] %v1907
        %2036 = vst [vmem:[%s207 + $0x368] sm:$0xff] %v1908
        %2037 = vst [vmem:[%s207 + $0x370] sm:$0xff] %v1909
        %2038 = vst [vmem:[%s207 + $0x378] sm:$0xff] %v1910
        %2039 = vst [vmem:[%s207 + $0x380] sm:$0xff] %v1911
        %2040 = vst [vmem:[%s207 + $0x388] sm:$0xff] %v1912
        %2041 = vst [vmem:[%s207 + $0x390] sm:$0xff] %v1913
        %2042 = vst [vmem:[%s207 + $0x398] sm:$0xff] %v1914
        %2043 = vst [vmem:[%s207 + $0x3a0] sm:$0xff] %v1915
        %2044 = vst [vmem:[%s207 + $0x3a8] sm:$0xff] %v1916
        %2045 = vst [vmem:[%s207 + $0x3b0] sm:$0xff] %v1917
        %2046 = vst [vmem:[%s207 + $0x3b8] sm:$0xff] %v1918
        %2047 = vst [vmem:[%s207 + $0x3c0] sm:$0xff] %v1919
        %2048 = vst [vmem:[%s207 + $0x3c8] sm:$0xff] %v1920
        %2049 = vst [vmem:[%s207 + $0x3d0] sm:$0xff] %v1921
        %2050 = vst [vmem:[%s207 + $0x3d8] sm:$0xff] %v1922
        %2051 = vst [vmem:[%s207 + $0x3e0] sm:$0xff] %v1923
        %2052 = vst [vmem:[%s207 + $0x3e8] sm:$0xff] %v1924
        %2053 = vst [vmem:[%s207 + $0x3f0] sm:$0xff] %v1925
        %2054 = vst [vmem:[%s207 + $0x3f8] sm:$0xff] %v1926
        %s2055 = sand.u32 %s82, 1
        %s2056 = scalar_lea.sflag [#allocation4], %s2055
        %s2057 = sand.u32 %s82, 1
        %s2058 = smul.addr %s2057, 1024
        %s2059 = scalar_lea.vmem [#allocation7], %s2058
        // Predicated region
        $region37: #{tpu_custom_call.1} parent=27 // pred_check
          %p2060 = pneg %p92
        $region38: #{tpu_custom_call.1} parent=27 // pred_check_branch
          %2062 = sbr.rel (%p2060) target = $region40
        $region39: #{tpu_custom_call.1} parent=27 // pred_region
          %s2063 = smul.u32 128, %s22
          %s2065 = ssub.s32 16384, 16384
          %2066 = vsyncadd %s2056, %s2065
          %s2067 = smul.addr %s2063, 128
          %s2068 = scalar_lea.hbm %s2, %s2067
          %s2069 = sshll.u32 %s2059, 4
          %s2070 = int_to_ptr.vmem [resolvable:$true] %s2069
          %2075 = dma.vmem_to_hbm [thread:$0]  %s2070, 16384, %s2068, %s2056, 128, 128, 8
        $region40: #{tpu_custom_call.1} parent=27 // pred_fallthru
          _
      $region28: #{tpu_custom_call.1} parent=5 // pred_fallthru
        _
      %p2076 = scmp.le.s32.totalorder 2, %s17
      // Predicated region
      $region41: #{tpu_custom_call.1} parent=5 // pred_check
        %p2077 = pneg %p2076
      $region42: #{tpu_custom_call.1} parent=5 // pred_check_branch
        %2079 = sbr.rel (%p2077) target = $region44
      $region43: #{tpu_custom_call.1} parent=5 // pred_region
        %s2080 = ssub.s32 %s17, 2
        // Predicated region
        $region45: #{tpu_custom_call.1} parent=43 // pred_check
          %p2081 = pneg %p98
        $region46: #{tpu_custom_call.1} parent=43 // pred_check_branch
          %2083 = sbr.rel (%p2081) target = $region48
        $region47: #{tpu_custom_call.1} parent=43 // pred_region
          %s2084 = sand.u32 %s83, 1
          %s2085 = scalar_lea.sflag [#allocation4], %s2084
          %s2086 = sand.u32 %s83, 1
          %s2087 = smul.addr %s2086, 1024
          %s2088 = scalar_lea.vmem [#allocation7], %s2087
          %2089 = dma.done %s2085, 16384
        $region48: #{tpu_custom_call.1} parent=43 // pred_fallthru
          _
      $region44: #{tpu_custom_call.1} parent=5 // pred_fallthru
        _
    $region6: #{tpu_custom_call.1} parent=1 // loop_footer
      %s21 = sadd.s32 1, %s17
    $region7: #{tpu_custom_call.1} parent=1 // loop_footer_branch
      %16 = sbr.rel target = $region3
    $region8: #{tpu_custom_call.1} parent=1 // loop_exit
      _
    %2090 = vsyncpa [#allocation3], 1
    %s2091 = scalar_lea.sflag [#allocation3], 1
    %2092 = vsyncpa %s2091, 1
    %2093 = vsyncpa [#allocation6], 1
    %s2094 = scalar_lea.sflag [#allocation6], 1
    %2095 = vsyncpa %s2094, 1
    %2096 = vsyncpa [#allocation4], 1
    %s2097 = scalar_lea.sflag [#allocation4], 1
    %2098 = vsyncpa %s2097, 1

</llo_original>
